<compile_context>
chip_gen: v5e
topology: v5e:2x2
jax: 0.10.0
libtpu: 0.0.40
codegen_flags: <defaults>
</compile_context>

<pallas_src>
import math
import functools

import jax
import jax.numpy as jnp
from jax import lax
from jax.experimental import pallas as pl
from jax.experimental.pallas import tpu as pltpu

# Small shapes consistent with the module (defaults scaled down).
B = 2            # batch
S = 16           # seq_len
P = 4            # pred_len
E = 16           # embed_size
H = 4            # nhead
HD = E // H      # head dim
F = 128          # dim_feedforward
K = 3            # conv1d kernel size (odd)
BS = B * S       # batch-stacked rows
HBS = H * BS     # head-stacked rows
LN_EPS = 1e-5
NEG_INF = -1e30  # stands in for float('-inf') in the causal mask
ATT_SCALE = 1.0 / math.sqrt(HD)

_VMEM = functools.partial(pl.BlockSpec, memory_space=pltpu.MemorySpace.VMEM)

# ---------------------------------------------------------------------------
# Two parameter slabs (built host-side, once):
#   * bf16 slab: every matmul operand (weights + 0/1 selector constants)
#   * f32  slab: biases, LayerNorm params, elementwise masks, additive attn mask
# Row offsets are tile-aligned; narrower params are zero-padded in lanes.
# ---------------------------------------------------------------------------
_W_LAYOUT = [  # name, rows, cols   (bf16, matmul operands)
    ("wqkv", E, 3 * E), ("wo", E, E),
    ("wff1", E, F), ("wff2", F, E),
    ("hw1", S * E, F), ("hw2", F, F // 2), ("hw3", F // 2, F // 4), ("hw4", F // 4, P),
    ("shcat", BS, K * BS),   # conv shift/selector:   x0 = shcat @ xcw
    ("hsel", BS, HBS),       # head-sum selector:     ctx = hsel @ ctx_stack
    ("selb", B, BS),         # per-batch row selector
    ("rep8", E, 8 * E),      # lane 8x replication of the E features
]

_F_LAYOUT = [  # name, rows, cols   (f32, biases / norms / elementwise constants)
    ("embias", BS, E), ("conv_w", K, E),
    ("bqkv", 1, 3 * E), ("bo", 1, E),
    ("ln1w", 1, E), ("ln1b", 1, E), ("ln2w", 1, E), ("ln2b", 1, E),
    ("bff1", 1, F), ("bff2", 1, E),
    ("hb1", 1, F), ("hb2", 1, F // 2), ("hb3", 1, F // 4), ("hb4", 1, P),
    ("head_mask", HBS, E), ("attn_bias", HBS, BS),
    ("bda", BS, 8 * E), ("bdb", BS, 8 * E),
]


def _build_offsets(layout, align):
    offs, row = {}, 0
    for name, r, c in layout:
        offs[name] = (row, r, c)
        row += -(-r // align) * align
    return offs, -(-row // align) * align


_W_OFF, W_ROWS = _build_offsets(_W_LAYOUT, 16)   # bf16 tile = (16, 128)
_F_OFF, F_ROWS = _build_offsets(_F_LAYOUT, 8)    # f32  tile = (8, 128)


def pack_params(params):
    """Pack weights/constants into one bf16 slab and one f32 slab (host side, once)."""
    iota = lambda shp, ax: lax.broadcasted_iota(jnp.int32, shp, ax)

    # fused QKV projection, attention scale folded into Q columns and bias
    wqkv = jnp.concatenate(
        [params["wq"] * ATT_SCALE, params["wk"], params["wv"]], axis=1)
    bqkv = jnp.concatenate(
        [params["bq"] * ATT_SCALE, params["bk"], params["bv"]], axis=1)

    conv_w = params["conv_w"]                                          # (K, E)

    # conv shift/selector: x0 = shcat @ [xb*cw0 ; xb*cw1 ; xb*cw2]
    #   shcat[r, j*BS + i] = 1  iff  i == r - (K-1-j) and (r % S) >= (K-1-j)
    r_i = iota((BS, K * BS), 0)
    c_i = iota((BS, K * BS), 1)
    blk_j = c_i // BS
    src = c_i % BS
    d = (K - 1) - blk_j
    shcat = ((src == r_i - d) & (r_i % S >= d)).astype(jnp.float32)

    # conv bias + positional encoding (module quirk: pe[b] per batch element,
    # broadcast over sequence) + (-1) left-pad correction, all per row r = b*S + s
    s_row = jnp.arange(BS) % S
    pad_corr = jnp.zeros((BS, E), jnp.float32)
    for dd in range(1, K):
        pad_corr = pad_corr + jnp.where(
            (s_row < dd)[:, None], -conv_w[K - 1 - dd][None, :], 0.0)
    embias = params["conv_b"] + params["pe"][jnp.arange(BS) // S] + pad_corr

    # attention constants
    rr = iota((HBS, BS), 0) % BS
    cc = iota((HBS, BS), 1)
    keep = ((rr // S) == (cc // S)) & ((cc % S) <= (rr % S))           # same batch & causal
    attn_bias = jnp.where(keep, 0.0, NEG_INF).astype(jnp.float32)
    head_mask = (iota((HBS, E), 1) // HD == iota((HBS, E), 0) // BS).astype(jnp.float32)
    hsel = (iota((BS, HBS), 1) % BS == iota((BS, HBS), 0)).astype(jnp.float32)

    # head-linear1 relayout constants
    selb = (iota((B, BS), 1) // S == iota((B, BS), 0)).astype(jnp.float32)
    rep8 = (iota((E, 8 * E), 1) % E == iota((E, 8 * E), 0)).astype(jnp.float32)
    bda = (iota((BS, 8 * E), 1) // E == (iota((BS, 8 * E), 0) % S)).astype(jnp.float32)
    bdb = ((iota((BS, 8 * E), 1) // E + 8) == (iota((BS, 8 * E), 0) % S)).astype(jnp.float32)

    wvals = dict(wqkv=wqkv, wo=params["wo"], wff1=params["wff1"], wff2=params["wff2"],
                 hw1=params["hw1"], hw2=params["hw2"], hw3=params["hw3"], hw4=params["hw4"],
                 shcat=shcat, hsel=hsel, selb=selb, rep8=rep8)
    fvals = dict(embias=embias, conv_w=conv_w, bqkv=bqkv, bo=params["bo"],
                 ln1w=params["ln1w"], ln1b=params["ln1b"],
                 ln2w=params["ln2w"], ln2b=params["ln2b"],
                 bff1=params["bff1"], bff2=params["bff2"],
                 hb1=params["hb1"], hb2=params["hb2"], hb3=params["hb3"], hb4=params["hb4"],
                 head_mask=head_mask, attn_bias=attn_bias, bda=bda, bdb=bdb)

    wslab = jnp.zeros((W_ROWS, 128), jnp.bfloat16)
    for name, rows, cols in _W_LAYOUT:
        r0 = _W_OFF[name][0]
        arr = jnp.asarray(wvals[name], jnp.float32).reshape(rows, cols)
        wslab = wslab.at[r0:r0 + rows, 0:cols].set(arr.astype(jnp.bfloat16))

    fslab = jnp.zeros((F_ROWS, 128), jnp.float32)
    for name, rows, cols in _F_LAYOUT:
        r0 = _F_OFF[name][0]
        arr = jnp.asarray(fvals[name], jnp.float32).reshape(rows, cols)
        fslab = fslab.at[r0:r0 + rows, 0:cols].set(arr)
    return wslab, fslab


# ---------------------------------------------------------------------------
# Fused kernel: conv embedding + PE + transformer encoder layer + MLP head
# ---------------------------------------------------------------------------
def fused_model_kernel(xcol_ref, wslab_ref, fslab_ref, o_ref):
    f32, bf16 = jnp.float32, jnp.bfloat16

    def w(name):  # bf16 matmul operand
        r0, rows, cols = _W_OFF[name]
        return wslab_ref[r0:r0 + rows, 0:cols]

    def c(name):  # f32 bias / constant
        r0, rows, cols = _F_OFF[name]
        return fslab_ref[r0:r0 + rows, 0:cols]

    def mxu(a, b):  # bf16 MXU operands, f32 accumulation
        return jnp.dot(a.astype(bf16), b.astype(bf16), preferred_element_type=f32)

    def mxu_nt(a, b):  # a @ b.T
        return lax.dot_general(a.astype(bf16), b.astype(bf16),
                               (((1,), (1,)), ((), ())), preferred_element_type=f32)

    def layer_norm(y, wln, bln):
        mu = jnp.mean(y, axis=-1, keepdims=True)
        var = jnp.mean((y - mu) ** 2, axis=-1, keepdims=True)
        return (y - mu) * lax.rsqrt(var + LN_EPS) * wln + bln

    # ---- causal Conv1d embedding + conv bias + PE (constants pre-folded) ----
    # row r = b*S + s;  x0 = shcat @ [xb*cw0 ; xb*cw1 ; xb*cw2] + embias
    xb = jnp.broadcast_to(xcol_ref[...], (BS, E))                      # (BS, E)
    cw = c("conv_w")                                                   # (K, E)
    xcw = jnp.concatenate([xb * cw[j:j + 1, :] for j in range(K)], axis=0)  # (K*BS, E)
    x0 = mxu(w("shcat"), xcw) + c("embias")                            # (BS, E)

    # ---- multi-head self-attention (fused QKV, heads stacked along sublanes) ----
    qkv = mxu(x0, w("wqkv")) + c("bqkv")                               # (BS, 3E)
    q = qkv[:, 0:E]
    k = qkv[:, E:2 * E]
    v = qkv[:, 2 * E:3 * E]

    hm = c("head_mask")                                                # (HBS, E)
    q_stack = jnp.concatenate([q] * H, axis=0) * hm                    # (HBS, E)
    scores = mxu_nt(q_stack, k) + c("attn_bias")                       # (HBS, BS)

    scores = scores - jnp.max(scores, axis=-1, keepdims=True)          # f32 softmax
    p = jnp.exp(scores)
    p = p * pl.reciprocal(jnp.sum(p, axis=-1, keepdims=True), approx=True)

    ctx_stack = mxu(p, v) * hm                                         # (HBS, E)
    ctx = mxu(w("hsel"), ctx_stack)                                    # (BS, E) head concat
    attn = mxu(ctx, w("wo")) + c("bo")
    y = layer_norm(x0 + attn, c("ln1w"), c("ln1b"))                    # post-LN 1

    # ---- feed-forward ----
    h1 = jnp.maximum(mxu(y, w("wff1")) + c("bff1"), 0.0)               # (BS, F)
    z = mxu(h1, w("wff2")) + c("bff2")
    enc = layer_norm(y + z, c("ln2w"), c("ln2b"))                      # post-LN 2, (BS, E)

    # ---- head linear1 over flattened (S*E): single K=256 matmul, no loop ----
    #   enc2[b, s*E+e] = enc[b*S+s, e]  via lane replication + block-diag masks + selector
    enc_t = mxu(enc, w("rep8"))                                        # (BS, 8E)
    ew = jnp.concatenate([enc_t * c("bda"), enc_t * c("bdb")], axis=1)  # (BS, S*E)
    enc2 = mxu(w("selb"), ew)                                          # (B, S*E)

    h = jnp.maximum(mxu(enc2, w("hw1")) + c("hb1"), 0.0)               # (B, F)
    h = jnp.maximum(mxu(h, w("hw2")) + c("hb2"), 0.0)                  # (B, F/2)
    h = jnp.maximum(mxu(h, w("hw3")) + c("hb3"), 0.0)                  # (B, F/4)
    o_ref[...] = mxu(h, w("hw4")) + c("hb4")                           # (B, P)


# ---------------------------------------------------------------------------
# Wrapper: everything (including conv window construction) happens in-kernel.
# The only host-side op is a bitcast reshape of x to a (B*S, 1) column.
# ---------------------------------------------------------------------------
def forecasting_forward(x, wslab, fslab):
    xcol = x.reshape(BS, 1).astype(jnp.float32)                        # bitcast reshape
    return pl.pallas_call(
        fused_model_kernel,
        out_shape=jax.ShapeDtypeStruct((B, P), jnp.float32),
        in_specs=[_VMEM(), _VMEM(), _VMEM()],
        out_specs=_VMEM(),
    )(xcol, wslab, fslab)


# ---------------------------------------------------------------------------
# Deterministic parameter initialization (shapes follow the PyTorch __init__)
# ---------------------------------------------------------------------------
def init_params(key):
    ks = jax.random.split(key, 24)

    def lin(k, fan_in, shape):
        bound = 1.0 / math.sqrt(fan_in)
        return jax.random.uniform(k, shape, jnp.float32, -bound, bound)

    # positional encoding buffer (max_len=S, d_model=E); only rows 0..B-1 are used
    position = jnp.arange(S, dtype=jnp.float32)[:, None]
    div_term = jnp.exp(jnp.arange(0, E, 2, dtype=jnp.float32) *
                       (-math.log(10000.0) / E))
    pe = jnp.zeros((S, E), jnp.float32)
    pe = pe.at[:, 0::2].set(jnp.sin(position * div_term))
    pe = pe.at[:, 1::2].set(jnp.cos(position * div_term))

    return dict(
        # Conv1d(1, E, K): torch weight (E,1,K) -> (K,E), bias -> (1,E)
        conv_w=lin(ks[0], K, (K, E)),
        conv_b=lin(ks[1], K, (1, E)),
        pe=pe[:B],                                   # (B, E) — pe[:batch, 0, :]
        # MultiheadAttention in/out projections, pre-transposed to (in, out)
        wq=lin(ks[2], E, (E, E)), wk=lin(ks[3], E, (E, E)), wv=lin(ks[4], E, (E, E)),
        bq=lin(ks[5], E, (1, E)), bk=lin(ks[6], E, (1, E)), bv=lin(ks[7], E, (1, E)),
        wo=lin(ks[8], E, (E, E)), bo=lin(ks[9], E, (1, E)),
        ln1w=jnp.ones((1, E), jnp.float32), ln1b=jnp.zeros((1, E), jnp.float32),
        # encoder FFN
        wff1=lin(ks[10], E, (E, F)), bff1=lin(ks[11], E, (1, F)),
        wff2=lin(ks[12], F, (F, E)), bff2=lin(ks[13], F, (1, E)),
        ln2w=jnp.ones((1, E), jnp.float32), ln2b=jnp.zeros((1, E), jnp.float32),
        # head MLP: (S*E) -> F -> F/2 -> F/4 -> P
        hw1=lin(ks[14], S * E, (S * E, F)),        hb1=lin(ks[15], S * E, (1, F)),
        hw2=lin(ks[16], F, (F, F // 2)),           hb2=lin(ks[17], F, (1, F // 2)),
        hw3=lin(ks[18], F // 2, (F // 2, F // 4)), hb3=lin(ks[19], F // 2, (1, F // 4)),
        hw4=lin(ks[20], F // 4, (F // 4, P)),      hb4=lin(ks[21], F // 4, (1, P)),
    )


# ---------------------------------------------------------------------------
# Pure-JAX f32 reference (mirrors the PyTorch forward, dropout = identity)
# ---------------------------------------------------------------------------
def reference_forward(x, params):
    xs = x[..., 0].astype(jnp.float32)                                 # (B, S)
    xpad = jnp.concatenate([jnp.full((B, K - 1), -1.0, jnp.float32), xs], axis=1)
    xwin = jnp.stack([xpad[:, j:j + S] for j in range(K)], axis=-1)    # (B, S, K)
    emb = jnp.einsum("bsk,ke->bse", xwin, params["conv_w"]) + params["conv_b"][0]
    x0 = emb + params["pe"][:, None, :]          # pe[:batch] broadcast over sequence

    q = (x0 @ params["wq"] + params["bq"][0]) * ATT_SCALE
    k = x0 @ params["wk"] + params["bk"][0]
    v = x0 @ params["wv"] + params["bv"][0]

    def split(t):  # (B,S,E) -> (B,H,S,HD)
        return t.reshape(B, S, H, HD).transpose(0, 2, 1, 3)

    qh, kh, vh = split(q), split(k), split(v)
    sc = jnp.einsum("bhqd,bhkd->bhqk", qh, kh)
    causal = jnp.tril(jnp.ones((S, S), bool))
    sc = jnp.where(causal[None, None], sc, -jnp.inf)
    p = jax.nn.softmax(sc, axis=-1)
    ctx = jnp.einsum("bhqk,bhkd->bhqd", p, vh).transpose(0, 2, 1, 3).reshape(B, S, E)
    attn = ctx @ params["wo"] + params["bo"][0]

    def ln(t, wln, bln):
        mu = t.mean(-1, keepdims=True)
        var = ((t - mu) ** 2).mean(-1, keepdims=True)
        return (t - mu) / jnp.sqrt(var + LN_EPS) * wln[0] + bln[0]

    y = ln(x0 + attn, params["ln1w"], params["ln1b"])
    h1 = jax.nn.relu(y @ params["wff1"] + params["bff1"][0])
    z = h1 @ params["wff2"] + params["bff2"][0]
    enc = ln(y + z, params["ln2w"], params["ln2b"])

    flat = enc.reshape(B, S * E)
    h = jax.nn.relu(flat @ params["hw1"] + params["hb1"][0])
    h = jax.nn.relu(h @ params["hw2"] + params["hb2"][0])
    h = jax.nn.relu(h @ params["hw3"] + params["hb3"][0])
    return h @ params["hw4"] + params["hb4"][0]


if __name__ == "__main__":
    key = jax.random.PRNGKey(0)
    pkey, xkey = jax.random.split(key)
    params = init_params(pkey)
    wslab, fslab = pack_params(params)               # one-time host-side packing
    x = jax.random.normal(xkey, (B, S, 1), jnp.float32)

    fwd = jax.jit(forecasting_forward)
    out = jax.block_until_ready(fwd(x, wslab, fslab))

    ref = reference_forward(x, params)
    diff = float(jnp.max(jnp.abs(out - ref)))

    assert out.shape == (B, P), out.shape
    assert bool(jnp.all(jnp.isfinite(out)))
    assert diff < 0.2, f"kernel deviates from f32 reference: max|diff|={diff}"
    print("KERNEL_OK")
</pallas_src>

<mosaic_0001>
module attributes {stable_mosaic.version = 11 : i64} {
  func.func @fused_model_kernel(%arg0: memref<32x1xf32, #tpu.memory_space<vmem>>, %arg1: memref<752x128xbf16, #tpu.memory_space<vmem>>, %arg2: memref<456x128xf32, #tpu.memory_space<vmem>>, %arg3: memref<2x4xf32, #tpu.memory_space<vmem>>) attributes {dimension_semantics = [], scalar_prefetch = 0 : i64, scratch_operands = 0 : i64, tpu.core_type = #tpu.core_type<tc>} {
    %c0 = arith.constant 0 : index
    %c0_0 = arith.constant 0 : index
    %0 = vector.load %arg0[%c0, %c0_0] : memref<32x1xf32, #tpu.memory_space<vmem>>, vector<32x1xf32>
    %1 = vector.shape_cast %0 : vector<32x1xf32> to vector<32x1xf32>
    %2 = vector.broadcast %1 : vector<32x1xf32> to vector<32x16xf32>
    %c32 = arith.constant 32 : index
    %c0_1 = arith.constant 0 : index
    %3 = vector.load %arg2[%c32, %c0_1] : memref<456x128xf32, #tpu.memory_space<vmem>>, vector<3x16xf32>
    %4 = vector.extract_strided_slice %3 {offsets = [0, 0], sizes = [1, 16], strides = [1, 1]} : vector<3x16xf32> to vector<1x16xf32>
    %5 = vector.broadcast %4 : vector<1x16xf32> to vector<32x16xf32>
    %6 = arith.mulf %2, %5 : vector<32x16xf32>
    %7 = vector.extract_strided_slice %3 {offsets = [1, 0], sizes = [1, 16], strides = [1, 1]} : vector<3x16xf32> to vector<1x16xf32>
    %8 = vector.broadcast %7 : vector<1x16xf32> to vector<32x16xf32>
    %9 = arith.mulf %2, %8 : vector<32x16xf32>
    %10 = vector.extract_strided_slice %3 {offsets = [2, 0], sizes = [1, 16], strides = [1, 1]} : vector<3x16xf32> to vector<1x16xf32>
    %11 = vector.broadcast %10 : vector<1x16xf32> to vector<32x16xf32>
    %12 = arith.mulf %2, %11 : vector<32x16xf32>
    %13 = tpu.concatenate %6, %9, %12 in 0 : vector<32x16xf32>, vector<32x16xf32>, vector<32x16xf32> -> vector<96x16xf32>
    %c656 = arith.constant 656 : index
    %c0_2 = arith.constant 0 : index
    %14 = vector.load %arg1[%c656, %c0_2] : memref<752x128xbf16, #tpu.memory_space<vmem>>, vector<32x96xbf16>
    %15 = arith.truncf %13 : vector<96x16xf32> to vector<96x16xbf16>
    %cst = arith.constant dense<0.000000e+00> : vector<32x16xf32>
    %16 = tpu.matmul %14, %15, %cst {dimension_numbers = #tpu.dot_dimension_numbers<[1], [0], [0], [1], [0, 0, 1, 1], [], []>} : vector<32x96xbf16>, vector<96x16xbf16>, vector<32x16xf32> -> vector<32x16xf32>
    %c0_3 = arith.constant 0 : index
    %c0_4 = arith.constant 0 : index
    %17 = vector.load %arg2[%c0_3, %c0_4] : memref<456x128xf32, #tpu.memory_space<vmem>>, vector<32x16xf32>
    %18 = arith.addf %16, %17 : vector<32x16xf32>
    %c0_5 = arith.constant 0 : index
    %c0_6 = arith.constant 0 : index
    %19 = vector.load %arg1[%c0_5, %c0_6] : memref<752x128xbf16, #tpu.memory_space<vmem>>, vector<16x48xbf16>
    %20 = arith.truncf %18 : vector<32x16xf32> to vector<32x16xbf16>
    %cst_7 = arith.constant dense<0.000000e+00> : vector<32x48xf32>
    %21 = tpu.matmul %20, %19, %cst_7 {dimension_numbers = #tpu.dot_dimension_numbers<[1], [0], [0], [1], [0, 0, 1, 1], [], []>} : vector<32x16xbf16>, vector<16x48xbf16>, vector<32x48xf32> -> vector<32x48xf32>
    %c40 = arith.constant 40 : index
    %c0_8 = arith.constant 0 : index
    %22 = vector.load %arg2[%c40, %c0_8] : memref<456x128xf32, #tpu.memory_space<vmem>>, vector<1x48xf32>
    %23 = vector.broadcast %22 : vector<1x48xf32> to vector<32x48xf32>
    %24 = arith.addf %21, %23 : vector<32x48xf32>
    %25 = vector.extract_strided_slice %24 {offsets = [0, 0], sizes = [32, 16], strides = [1, 1]} : vector<32x48xf32> to vector<32x16xf32>
    %26 = vector.extract_strided_slice %24 {offsets = [0, 16], sizes = [32, 16], strides = [1, 1]} : vector<32x48xf32> to vector<32x16xf32>
    %27 = vector.extract_strided_slice %24 {offsets = [0, 32], sizes = [32, 16], strides = [1, 1]} : vector<32x48xf32> to vector<32x16xf32>
    %c136 = arith.constant 136 : index
    %c0_9 = arith.constant 0 : index
    %28 = vector.load %arg2[%c136, %c0_9] : memref<456x128xf32, #tpu.memory_space<vmem>>, vector<128x16xf32>
    %29 = tpu.concatenate %25, %25, %25, %25 in 0 : vector<32x16xf32>, vector<32x16xf32>, vector<32x16xf32>, vector<32x16xf32> -> vector<128x16xf32>
    %30 = arith.mulf %29, %28 : vector<128x16xf32>
    %31 = arith.truncf %30 : vector<128x16xf32> to vector<128x16xbf16>
    %32 = arith.truncf %26 : vector<32x16xf32> to vector<32x16xbf16>
    %cst_10 = arith.constant dense<0.000000e+00> : vector<128x32xf32>
    %33 = tpu.matmul %31, %32, %cst_10 {dimension_numbers = #tpu.dot_dimension_numbers<[1], [1], [0], [0], [0, 0, 1, 0], [], []>} : vector<128x16xbf16>, vector<32x16xbf16>, vector<128x32xf32> -> vector<128x32xf32>
    %c264 = arith.constant 264 : index
    %c0_11 = arith.constant 0 : index
    %34 = vector.load %arg2[%c264, %c0_11] : memref<456x128xf32, #tpu.memory_space<vmem>>, vector<128x32xf32>
    %35 = arith.addf %33, %34 : vector<128x32xf32>
    %cst_12 = arith.constant dense<0xFF800000> : vector<128xf32>
    %36 = vector.multi_reduction <maximumf>, %35, %cst_12 [1] : vector<128x32xf32> to vector<128xf32>
    %37 = vector.shape_cast %36 : vector<128xf32> to vector<128x1xf32>
    %38 = vector.broadcast %37 : vector<128x1xf32> to vector<128x32xf32>
    %39 = arith.subf %35, %38 : vector<128x32xf32>
    %40 = math.exp %39 : vector<128x32xf32>
    %cst_13 = arith.constant dense<0.000000e+00> : vector<128xf32>
    %41 = vector.multi_reduction <add>, %40, %cst_13 [1] : vector<128x32xf32> to vector<128xf32>
    %42 = vector.shape_cast %41 : vector<128xf32> to vector<128x1xf32>
    %43 = tpu.reciprocal %42 {approx = true} : vector<128x1xf32> -> vector<128x1xf32>
    %44 = vector.broadcast %43 : vector<128x1xf32> to vector<128x32xf32>
    %45 = arith.mulf %40, %44 : vector<128x32xf32>
    %46 = arith.truncf %45 : vector<128x32xf32> to vector<128x32xbf16>
    %47 = arith.truncf %27 : vector<32x16xf32> to vector<32x16xbf16>
    %cst_14 = arith.constant dense<0.000000e+00> : vector<128x16xf32>
    %48 = tpu.matmul %46, %47, %cst_14 {dimension_numbers = #tpu.dot_dimension_numbers<[1], [0], [0], [1], [0, 0, 1, 1], [], []>} : vector<128x32xbf16>, vector<32x16xbf16>, vector<128x16xf32> -> vector<128x16xf32>
    %49 = arith.mulf %48, %28 : vector<128x16xf32>
    %c688 = arith.constant 688 : index
    %c0_15 = arith.constant 0 : index
    %50 = vector.load %arg1[%c688, %c0_15] : memref<752x128xbf16, #tpu.memory_space<vmem>>, vector<32x128xbf16>
    %51 = arith.truncf %49 : vector<128x16xf32> to vector<128x16xbf16>
    %cst_16 = arith.constant dense<0.000000e+00> : vector<32x16xf32>
    %52 = tpu.matmul %50, %51, %cst_16 {dimension_numbers = #tpu.dot_dimension_numbers<[1], [0], [0], [1], [0, 0, 1, 1], [], []>} : vector<32x128xbf16>, vector<128x16xbf16>, vector<32x16xf32> -> vector<32x16xf32>
    %c16 = arith.constant 16 : index
    %c0_17 = arith.constant 0 : index
    %53 = vector.load %arg1[%c16, %c0_17] : memref<752x128xbf16, #tpu.memory_space<vmem>>, vector<16x16xbf16>
    %54 = arith.truncf %52 : vector<32x16xf32> to vector<32x16xbf16>
    %cst_18 = arith.constant dense<0.000000e+00> : vector<32x16xf32>
    %55 = tpu.matmul %54, %53, %cst_18 {dimension_numbers = #tpu.dot_dimension_numbers<[1], [0], [0], [1], [0, 0, 1, 1], [], []>} : vector<32x16xbf16>, vector<16x16xbf16>, vector<32x16xf32> -> vector<32x16xf32>
    %c48 = arith.constant 48 : index
    %c0_19 = arith.constant 0 : index
    %56 = vector.load %arg2[%c48, %c0_19] : memref<456x128xf32, #tpu.memory_space<vmem>>, vector<1x16xf32>
    %57 = vector.broadcast %56 : vector<1x16xf32> to vector<32x16xf32>
    %58 = arith.addf %55, %57 : vector<32x16xf32>
    %59 = arith.addf %18, %58 : vector<32x16xf32>
    %c56 = arith.constant 56 : index
    %c0_20 = arith.constant 0 : index
    %60 = vector.load %arg2[%c56, %c0_20] : memref<456x128xf32, #tpu.memory_space<vmem>>, vector<1x16xf32>
    %c64 = arith.constant 64 : index
    %c0_21 = arith.constant 0 : index
    %61 = vector.load %arg2[%c64, %c0_21] : memref<456x128xf32, #tpu.memory_space<vmem>>, vector<1x16xf32>
    %cst_22 = arith.constant dense<0.000000e+00> : vector<32xf32>
    %62 = vector.multi_reduction <add>, %59, %cst_22 [1] : vector<32x16xf32> to vector<32xf32>
    %63 = vector.shape_cast %62 : vector<32xf32> to vector<32x1xf32>
    %cst_23 = arith.constant 1.600000e+01 : f32
    %64 = vector.broadcast %cst_23 : f32 to vector<32x1xf32>
    %65 = arith.divf %63, %64 : vector<32x1xf32>
    %66 = vector.broadcast %65 : vector<32x1xf32> to vector<32x16xf32>
    %67 = arith.subf %59, %66 : vector<32x16xf32>
    %68 = arith.mulf %67, %67 : vector<32x16xf32>
    %cst_24 = arith.constant dense<0.000000e+00> : vector<32xf32>
    %69 = vector.multi_reduction <add>, %68, %cst_24 [1] : vector<32x16xf32> to vector<32xf32>
    %70 = vector.shape_cast %69 : vector<32xf32> to vector<32x1xf32>
    %cst_25 = arith.constant 1.600000e+01 : f32
    %71 = vector.broadcast %cst_25 : f32 to vector<32x1xf32>
    %72 = arith.divf %70, %71 : vector<32x1xf32>
    %73 = vector.broadcast %65 : vector<32x1xf32> to vector<32x16xf32>
    %74 = arith.subf %59, %73 : vector<32x16xf32>
    %cst_26 = arith.constant 9.99999974E-6 : f32
    %75 = vector.broadcast %cst_26 : f32 to vector<32x1xf32>
    %76 = arith.addf %72, %75 : vector<32x1xf32>
    %77 = math.rsqrt %76 : vector<32x1xf32>
    %78 = vector.broadcast %77 : vector<32x1xf32> to vector<32x16xf32>
    %79 = arith.mulf %74, %78 : vector<32x16xf32>
    %80 = vector.broadcast %60 : vector<1x16xf32> to vector<32x16xf32>
    %81 = arith.mulf %79, %80 : vector<32x16xf32>
    %82 = vector.broadcast %61 : vector<1x16xf32> to vector<32x16xf32>
    %83 = arith.addf %81, %82 : vector<32x16xf32>
    %c32_27 = arith.constant 32 : index
    %c0_28 = arith.constant 0 : index
    %84 = vector.load %arg1[%c32_27, %c0_28] : memref<752x128xbf16, #tpu.memory_space<vmem>>, vector<16x128xbf16>
    %85 = arith.truncf %83 : vector<32x16xf32> to vector<32x16xbf16>
    %cst_29 = arith.constant dense<0.000000e+00> : vector<32x128xf32>
    %86 = tpu.matmul %85, %84, %cst_29 {dimension_numbers = #tpu.dot_dimension_numbers<[1], [0], [0], [1], [0, 0, 1, 1], [], []>} : vector<32x16xbf16>, vector<16x128xbf16>, vector<32x128xf32> -> vector<32x128xf32>
    %c88 = arith.constant 88 : index
    %c0_30 = arith.constant 0 : index
    %87 = vector.load %arg2[%c88, %c0_30] : memref<456x128xf32, #tpu.memory_space<vmem>>, vector<1x128xf32>
    %88 = vector.broadcast %87 : vector<1x128xf32> to vector<32x128xf32>
    %89 = arith.addf %86, %88 : vector<32x128xf32>
    %cst_31 = arith.constant 0.000000e+00 : f32
    %90 = vector.broadcast %cst_31 : f32 to vector<32x128xf32>
    %91 = arith.maximumf %89, %90 : vector<32x128xf32>
    %c48_32 = arith.constant 48 : index
    %c0_33 = arith.constant 0 : index
    %92 = vector.load %arg1[%c48_32, %c0_33] : memref<752x128xbf16, #tpu.memory_space<vmem>>, vector<128x16xbf16>
    %93 = arith.truncf %91 : vector<32x128xf32> to vector<32x128xbf16>
    %cst_34 = arith.constant dense<0.000000e+00> : vector<32x16xf32>
    %94 = tpu.matmul %93, %92, %cst_34 {dimension_numbers = #tpu.dot_dimension_numbers<[1], [0], [0], [1], [0, 0, 1, 1], [], []>} : vector<32x128xbf16>, vector<128x16xbf16>, vector<32x16xf32> -> vector<32x16xf32>
    %c96 = arith.constant 96 : index
    %c0_35 = arith.constant 0 : index
    %95 = vector.load %arg2[%c96, %c0_35] : memref<456x128xf32, #tpu.memory_space<vmem>>, vector<1x16xf32>
    %96 = vector.broadcast %95 : vector<1x16xf32> to vector<32x16xf32>
    %97 = arith.addf %94, %96 : vector<32x16xf32>
    %98 = arith.addf %83, %97 : vector<32x16xf32>
    %c72 = arith.constant 72 : index
    %c0_36 = arith.constant 0 : index
    %99 = vector.load %arg2[%c72, %c0_36] : memref<456x128xf32, #tpu.memory_space<vmem>>, vector<1x16xf32>
    %c80 = arith.constant 80 : index
    %c0_37 = arith.constant 0 : index
    %100 = vector.load %arg2[%c80, %c0_37] : memref<456x128xf32, #tpu.memory_space<vmem>>, vector<1x16xf32>
    %cst_38 = arith.constant dense<0.000000e+00> : vector<32xf32>
    %101 = vector.multi_reduction <add>, %98, %cst_38 [1] : vector<32x16xf32> to vector<32xf32>
    %102 = vector.shape_cast %101 : vector<32xf32> to vector<32x1xf32>
    %cst_39 = arith.constant 1.600000e+01 : f32
    %103 = vector.broadcast %cst_39 : f32 to vector<32x1xf32>
    %104 = arith.divf %102, %103 : vector<32x1xf32>
    %105 = vector.broadcast %104 : vector<32x1xf32> to vector<32x16xf32>
    %106 = arith.subf %98, %105 : vector<32x16xf32>
    %107 = arith.mulf %106, %106 : vector<32x16xf32>
    %cst_40 = arith.constant dense<0.000000e+00> : vector<32xf32>
    %108 = vector.multi_reduction <add>, %107, %cst_40 [1] : vector<32x16xf32> to vector<32xf32>
    %109 = vector.shape_cast %108 : vector<32xf32> to vector<32x1xf32>
    %cst_41 = arith.constant 1.600000e+01 : f32
    %110 = vector.broadcast %cst_41 : f32 to vector<32x1xf32>
    %111 = arith.divf %109, %110 : vector<32x1xf32>
    %112 = vector.broadcast %104 : vector<32x1xf32> to vector<32x16xf32>
    %113 = arith.subf %98, %112 : vector<32x16xf32>
    %cst_42 = arith.constant 9.99999974E-6 : f32
    %114 = vector.broadcast %cst_42 : f32 to vector<32x1xf32>
    %115 = arith.addf %111, %114 : vector<32x1xf32>
    %116 = math.rsqrt %115 : vector<32x1xf32>
    %117 = vector.broadcast %116 : vector<32x1xf32> to vector<32x16xf32>
    %118 = arith.mulf %113, %117 : vector<32x16xf32>
    %119 = vector.broadcast %99 : vector<1x16xf32> to vector<32x16xf32>
    %120 = arith.mulf %118, %119 : vector<32x16xf32>
    %121 = vector.broadcast %100 : vector<1x16xf32> to vector<32x16xf32>
    %122 = arith.addf %120, %121 : vector<32x16xf32>
    %c736 = arith.constant 736 : index
    %c0_43 = arith.constant 0 : index
    %123 = vector.load %arg1[%c736, %c0_43] : memref<752x128xbf16, #tpu.memory_space<vmem>>, vector<16x128xbf16>
    %124 = arith.truncf %122 : vector<32x16xf32> to vector<32x16xbf16>
    %cst_44 = arith.constant dense<0.000000e+00> : vector<32x128xf32>
    %125 = tpu.matmul %124, %123, %cst_44 {dimension_numbers = #tpu.dot_dimension_numbers<[1], [0], [0], [1], [0, 0, 1, 1], [], []>} : vector<32x16xbf16>, vector<16x128xbf16>, vector<32x128xf32> -> vector<32x128xf32>
    %c392 = arith.constant 392 : index
    %c0_45 = arith.constant 0 : index
    %126 = vector.load %arg2[%c392, %c0_45] : memref<456x128xf32, #tpu.memory_space<vmem>>, vector<32x128xf32>
    %127 = arith.mulf %125, %126 : vector<32x128xf32>
    %c424 = arith.constant 424 : index
    %c0_46 = arith.constant 0 : index
    %128 = vector.load %arg2[%c424, %c0_46] : memref<456x128xf32, #tpu.memory_space<vmem>>, vector<32x128xf32>
    %129 = arith.mulf %125, %128 : vector<32x128xf32>
    %130 = tpu.concatenate %127, %129 in 1 : vector<32x128xf32>, vector<32x128xf32> -> vector<32x256xf32>
    %c720 = arith.constant 720 : index
    %c0_47 = arith.constant 0 : index
    %131 = vector.load %arg1[%c720, %c0_47] : memref<752x128xbf16, #tpu.memory_space<vmem>>, vector<2x32xbf16>
    %132 = arith.truncf %130 : vector<32x256xf32> to vector<32x256xbf16>
    %cst_48 = arith.constant dense<0.000000e+00> : vector<2x256xf32>
    %133 = tpu.matmul %131, %132, %cst_48 {dimension_numbers = #tpu.dot_dimension_numbers<[1], [0], [0], [1], [0, 0, 1, 1], [], []>} : vector<2x32xbf16>, vector<32x256xbf16>, vector<2x256xf32> -> vector<2x256xf32>
    %c176 = arith.constant 176 : index
    %c0_49 = arith.constant 0 : index
    %134 = vector.load %arg1[%c176, %c0_49] : memref<752x128xbf16, #tpu.memory_space<vmem>>, vector<256x128xbf16>
    %135 = arith.truncf %133 : vector<2x256xf32> to vector<2x256xbf16>
    %cst_50 = arith.constant dense<0.000000e+00> : vector<2x128xf32>
    %136 = tpu.matmul %135, %134, %cst_50 {dimension_numbers = #tpu.dot_dimension_numbers<[1], [0], [0], [1], [0, 0, 1, 1], [], []>} : vector<2x256xbf16>, vector<256x128xbf16>, vector<2x128xf32> -> vector<2x128xf32>
    %c104 = arith.constant 104 : index
    %c0_51 = arith.constant 0 : index
    %137 = vector.load %arg2[%c104, %c0_51] : memref<456x128xf32, #tpu.memory_space<vmem>>, vector<1x128xf32>
    %138 = vector.broadcast %137 : vector<1x128xf32> to vector<2x128xf32>
    %139 = arith.addf %136, %138 : vector<2x128xf32>
    %cst_52 = arith.constant 0.000000e+00 : f32
    %140 = vector.broadcast %cst_52 : f32 to vector<2x128xf32>
    %141 = arith.maximumf %139, %140 : vector<2x128xf32>
    %c432 = arith.constant 432 : index
    %c0_53 = arith.constant 0 : index
    %142 = vector.load %arg1[%c432, %c0_53] : memref<752x128xbf16, #tpu.memory_space<vmem>>, vector<128x64xbf16>
    %143 = arith.truncf %141 : vector<2x128xf32> to vector<2x128xbf16>
    %cst_54 = arith.constant dense<0.000000e+00> : vector<2x64xf32>
    %144 = tpu.matmul %143, %142, %cst_54 {dimension_numbers = #tpu.dot_dimension_numbers<[1], [0], [0], [1], [0, 0, 1, 1], [], []>} : vector<2x128xbf16>, vector<128x64xbf16>, vector<2x64xf32> -> vector<2x64xf32>
    %c112 = arith.constant 112 : index
    %c0_55 = arith.constant 0 : index
    %145 = vector.load %arg2[%c112, %c0_55] : memref<456x128xf32, #tpu.memory_space<vmem>>, vector<1x64xf32>
    %146 = vector.broadcast %145 : vector<1x64xf32> to vector<2x64xf32>
    %147 = arith.addf %144, %146 : vector<2x64xf32>
    %cst_56 = arith.constant 0.000000e+00 : f32
    %148 = vector.broadcast %cst_56 : f32 to vector<2x64xf32>
    %149 = arith.maximumf %147, %148 : vector<2x64xf32>
    %c560 = arith.constant 560 : index
    %c0_57 = arith.constant 0 : index
    %150 = vector.load %arg1[%c560, %c0_57] : memref<752x128xbf16, #tpu.memory_space<vmem>>, vector<64x32xbf16>
    %151 = arith.truncf %149 : vector<2x64xf32> to vector<2x64xbf16>
    %cst_58 = arith.constant dense<0.000000e+00> : vector<2x32xf32>
    %152 = tpu.matmul %151, %150, %cst_58 {dimension_numbers = #tpu.dot_dimension_numbers<[1], [0], [0], [1], [0, 0, 1, 1], [], []>} : vector<2x64xbf16>, vector<64x32xbf16>, vector<2x32xf32> -> vector<2x32xf32>
    %c120 = arith.constant 120 : index
    %c0_59 = arith.constant 0 : index
    %153 = vector.load %arg2[%c120, %c0_59] : memref<456x128xf32, #tpu.memory_space<vmem>>, vector<1x32xf32>
    %154 = vector.broadcast %153 : vector<1x32xf32> to vector<2x32xf32>
    %155 = arith.addf %152, %154 : vector<2x32xf32>
    %cst_60 = arith.constant 0.000000e+00 : f32
    %156 = vector.broadcast %cst_60 : f32 to vector<2x32xf32>
    %157 = arith.maximumf %155, %156 : vector<2x32xf32>
    %c624 = arith.constant 624 : index
    %c0_61 = arith.constant 0 : index
    %158 = vector.load %arg1[%c624, %c0_61] : memref<752x128xbf16, #tpu.memory_space<vmem>>, vector<32x4xbf16>
    %159 = arith.truncf %157 : vector<2x32xf32> to vector<2x32xbf16>
    %cst_62 = arith.constant dense<0.000000e+00> : vector<2x4xf32>
    %160 = tpu.matmul %159, %158, %cst_62 {dimension_numbers = #tpu.dot_dimension_numbers<[1], [0], [0], [1], [0, 0, 1, 1], [], []>} : vector<2x32xbf16>, vector<32x4xbf16>, vector<2x4xf32> -> vector<2x4xf32>
    %c128 = arith.constant 128 : index
    %c0_63 = arith.constant 0 : index
    %161 = vector.load %arg2[%c128, %c0_63] : memref<456x128xf32, #tpu.memory_space<vmem>>, vector<1x4xf32>
    %162 = vector.broadcast %161 : vector<1x4xf32> to vector<2x4xf32>
    %163 = arith.addf %160, %162 : vector<2x4xf32>
    %c0_64 = arith.constant 0 : index
    %c0_65 = arith.constant 0 : index
    %164 = vector.load %arg3[%c0_64, %c0_65] : memref<2x4xf32, #tpu.memory_space<vmem>>, vector<2x4xf32>
    tpu.vector_store %arg3[%c0_64, %c0_65], %163 {strides = array<i32>} : memref<2x4xf32, #tpu.memory_space<vmem>>, vector<2x4xf32>,
    return
  }
}

</mosaic_0001>

<llo_original>
// kernel: forecasting_forward.1
$region0: #{forecasting_forward.1}
  #allocation0 [shape = 'u32[]', space=smem, size = 0x4, offset = 0x4, fixed_abs, tag = 'smem constant byte address 0x4 - core index']
  #allocation1 [shape = 'u32[72,128]{1,0:T(1,128)}', space=vmem, size = 0x9000, scoped, tag = 'internal scratch']
  %s0 = inlined_call_operand.vmem [shape: f32[32,1], index: 0, kind: input, shape index: {}]
  %s1 = inlined_call_operand.hbm [shape: bf16[752,128], index: 1, kind: input, shape index: {}]
  %s2 = inlined_call_operand.hbm [shape: f32[456,128], index: 2, kind: input, shape index: {}]
  %s3 = inlined_call_operand.hbm [shape: f32[2,4], index: 3, kind: output, shape index: {}]
  %s4 = sld [smem:[#allocation0]]
  $region30: #{forecasting_forward.1} parent=0
    _
  %s6 = ssub.s32 1, %s4
  %s7 = scalar_select 0, %s6, %s4
  $region1: #{forecasting_forward.1} parent=0
    #allocation2 [shape = 'u8[192512]{0}', space=vmem, size = 0x2f000, scoped, tag = 'input window, operand 1, single buffered']
    #allocation3 [shape = 's32[1]{0}', space=sflag, size = 0x4, scoped, tag = 'scoped memory for forecasting_forward.1']
    #allocation4 [shape = 's32[1]{0}', space=sflag, size = 0x4, scoped, tag = 'scoped memory for forecasting_forward.1']
    #allocation5 [shape = 'u8[233472]{0}', space=vmem, size = 0x39000, scoped, tag = 'input window, operand 2, single buffered']
    #allocation6 [shape = 's32[1]{0}', space=sflag, size = 0x4, scoped, tag = 'scoped memory for forecasting_forward.1']
    #allocation7 [shape = 'u8[1024]{0}', space=vmem, size = 0x400, scoped, tag = 'output window, operand 0, single buffered']
    %8 = vsyncpa [#allocation3], 0
    %9 = vsyncpa [#allocation6], 0
    %10 = vsyncpa [#allocation4], 0
    // Predicated region
    $region2: #{forecasting_forward.1} parent=1 // pred_check
      _
    $region3: #{forecasting_forward.1} parent=1 // pred_check_branch
      %12 = sbr.rel (0) target = $region5
    $region4: #{forecasting_forward.1} parent=1 // pred_region
      _
    $region5: #{forecasting_forward.1} parent=1 // pred_fallthru
      _
    // Predicated region
    $region6: #{forecasting_forward.1} parent=1 // pred_check
      _
    $region7: #{forecasting_forward.1} parent=1 // pred_check_branch
      %14 = sbr.rel (0) target = $region9
    $region8: #{forecasting_forward.1} parent=1 // pred_region
      %16 = vsyncadd [#allocation3], 0
      %s17 = sshll.u32 %s1, 4
      %s18 = int_to_ptr.hbm [resolvable:$true] %s17
      %s19 = sshll.u32 [#allocation2], 4
      %s20 = int_to_ptr.vmem [resolvable:$true] %s19
      %25 = dma.hbm_to_vmem [thread:$0]  %s18, 6016, %s20, [#allocation3], 64, 64, 4
    $region9: #{forecasting_forward.1} parent=1 // pred_fallthru
      _
    // Predicated region
    $region10: #{forecasting_forward.1} parent=1 // pred_check
      _
    $region11: #{forecasting_forward.1} parent=1 // pred_check_branch
      %27 = sbr.rel (0) target = $region13
    $region12: #{forecasting_forward.1} parent=1 // pred_region
      %29 = vsyncadd [#allocation6], 0
      %s30 = sshll.u32 %s2, 4
      %s31 = int_to_ptr.hbm [resolvable:$true] %s30
      %s32 = sshll.u32 [#allocation5], 4
      %s33 = int_to_ptr.vmem [resolvable:$true] %s32
      %38 = dma.hbm_to_vmem [thread:$0]  %s31, 7296, %s33, [#allocation6], 128, 128, 8
    $region13: #{forecasting_forward.1} parent=1 // pred_fallthru
      _
    // Predicated region
    $region14: #{forecasting_forward.1} parent=1 // pred_check
      _
    $region15: #{forecasting_forward.1} parent=1 // pred_check_branch
      %40 = sbr.rel (0) target = $region17
    $region16: #{forecasting_forward.1} parent=1 // pred_region
      %42 = dma.done [#allocation3], 6016
    $region17: #{forecasting_forward.1} parent=1 // pred_fallthru
      _
    // Predicated region
    $region18: #{forecasting_forward.1} parent=1 // pred_check
      _
    $region19: #{forecasting_forward.1} parent=1 // pred_check_branch
      %44 = sbr.rel (0) target = $region21
    $region20: #{forecasting_forward.1} parent=1 // pred_region
      %46 = dma.done [#allocation6], 7296
    $region21: #{forecasting_forward.1} parent=1 // pred_fallthru
      _
    %v48 = vld [vmem:[%s0] sm:$0xff]
    %v49 = vld [vmem:[%s0 + $0x8] sm:$0xff]
    %v50 = vld [vmem:[%s0 + $0x10] sm:$0xff]
    %v51 = vld [vmem:[%s0 + $0x18] sm:$0xff]
    %53 = vset.pattern.permute.xlu0 0
    %54 = vperm.xlu0 %53, %v48
    %v55 = vpop.permute.xlu0 %54
    %58 = vset.pattern.permute.xlu0 0
    %59 = vperm.xlu0 %58, %v49
    %v60 = vpop.permute.xlu0 %59
    %63 = vset.pattern.permute.xlu0 0
    %64 = vperm.xlu0 %63, %v50
    %v65 = vpop.permute.xlu0 %64
    %68 = vset.pattern.permute.xlu0 0
    %69 = vperm.xlu0 %68, %v51
    %v70 = vpop.permute.xlu0 %69
    %v72 = vld [vmem:[#allocation5 + $0x20] sm:$0x7]
    %v73 = vperm.slane %v72, 0
    %v74 = vmul.f32 %v55, %v73
    %v75 = vmul.f32 %v60, %v73
    %v76 = vmul.f32 %v65, %v73
    %v77 = vmul.f32 %v70, %v73
    %v78 = vperm.slane %v72, 1
    %v79 = vmul.f32 %v55, %v78
    %v80 = vmul.f32 %v60, %v78
    %v81 = vmul.f32 %v65, %v78
    %v82 = vmul.f32 %v70, %v78
    %v83 = vperm.slane %v72, 2
    %v84 = vmul.f32 %v55, %v83
    %v85 = vmul.f32 %v60, %v83
    %v86 = vmul.f32 %v65, %v83
    %v87 = vmul.f32 %v70, %v83
    %v88 = vld [vmem:[#allocation2 + $0x148] sm:$0xf]
    %v89 = vld [vmem:[#allocation2 + $0x14c] sm:$0xf]
    %v90 = vld [vmem:[#allocation2 + $0x150] sm:$0xf]
    %v91 = vld [vmem:[#allocation2 + $0x154] sm:$0xf]
    %v92 = vpack.c.bf16 %v75, %v74
    %v93 = vpack.c.bf16 %v77, %v76
    %v94 = vpack.c.bf16 %v80, %v79
    %v95 = vpack.c.bf16 %v82, %v81
    %v96 = vpack.c.bf16 %v85, %v84
    %v97 = vpack.c.bf16 %v87, %v86
    %v98 = vld [vmem:[#allocation5] sm:$0xff]
    %v99 = vld [vmem:[#allocation5 + $0x8] sm:$0xff]
    %v100 = vld [vmem:[#allocation5 + $0x10] sm:$0xff]
    %v101 = vld [vmem:[#allocation5 + $0x18] sm:$0xff]
    %v106 = vunpack.c.l.b16 %v88
    %v107 = vunpack.c.l.b16 %v89
    %v108 = vunpack.c.l.b16 %v90
    %v109 = vunpack.c.l.b16 %v91
    %v110 = vpack.c.b16 %v107, %v106
    %v111 = vpack.c.b16 %v109, %v108
    %vm112 = vcmask 785408
    %v114 = vsel %vm112, %v110, 0
    %v117 = vsel %vm112, %v111, 0
    %119 = vmatpush.bf16.msra.mxu0 0
    %120 = vmatpush.bf16.msra.mxu0 0
    %121 = vmatpush.bf16.msra.mxu0 %v97
    %122 = vmatpush.bf16.msra.mxu0 %v96
    %123 = vmatpush.bf16.msra.mxu0 %v95
    %124 = vmatpush.bf16.msra.mxu0 %v94
    %125 = vmatpush.bf16.msra.mxu0 %v93
    %126 = vmatpush.bf16.msra.mxu0 %v92
    %127 = vmatmul.bf16.gmra.mxu0 %v114
    %v128 = vpop.f32.mrf.mxu0
    %v129 = vadd.f32 %v98, %v128
    %v130 = vpop.f32.mrf.mxu0
    %v131 = vadd.f32 %v99, %v130
    %132 = vmatmul.bf16.gmra.mxu0 %v117
    %v133 = vpop.f32.mrf.mxu0
    %v134 = vadd.f32 %v100, %v133
    %v135 = vpop.f32.mrf.mxu0
    %v136 = vadd.f32 %v101, %v135
    %137 = vdwg.mxu0
    %v138 = vld [vmem:[#allocation2] sm:$0xf]
    %v139 = vld [vmem:[#allocation2 + $0x4] sm:$0xf]
    %v140 = vpack.c.bf16 %v131, %v129
    %v141 = vpack.c.bf16 %v136, %v134
    %v142 = vld [vmem:[#allocation5 + $0x28] sm:$0x1]
    %v143 = vperm.slane %v142, 0
    %v146 = vunpack.c.l.b16 %v138
    %v147 = vunpack.c.l.b16 %v139
    %v148 = vpack.c.b16 %v147, %v146
    %vm150 = vcmask 130048
    %v152 = vsel %vm150, %v140, 0
    %v155 = vsel %vm150, %v141, 0
    %157 = vmatpush.bf16.msra.mxu0 0
    %158 = vmatpush.bf16.msra.mxu0 0
    %159 = vmatpush.bf16.msra.mxu0 0
    %160 = vmatpush.bf16.msra.mxu0 0
    %161 = vmatpush.bf16.msra.mxu0 0
    %162 = vmatpush.bf16.msra.mxu0 0
    %163 = vmatpush.bf16.msra.mxu0 0
    %164 = vmatpush.bf16.msra.mxu0 %v148
    %165 = vmatmul.bf16.gmra.mxu0 %v152
    %v166 = vpop.f32.mrf.mxu0
    %v167 = vadd.f32 %v143, %v166
    %v168 = vpop.f32.mrf.mxu0
    %v169 = vadd.f32 %v143, %v168
    %170 = vmatmul.bf16.gmra.mxu0 %v155
    %v171 = vpop.f32.mrf.mxu0
    %v172 = vadd.f32 %v143, %v171
    %v173 = vpop.f32.mrf.mxu0
    %v174 = vadd.f32 %v143, %v173
    %175 = vdwg.mxu0
    %v176 = vld [vmem:[#allocation5 + $0x88] sm:$0xff]
    %v177 = vld [vmem:[#allocation5 + $0x90] sm:$0xff]
    %v178 = vld [vmem:[#allocation5 + $0x98] sm:$0xff]
    %v179 = vld [vmem:[#allocation5 + $0xa0] sm:$0xff]
    %v180 = vld [vmem:[#allocation5 + $0xa8] sm:$0xff]
    %v181 = vld [vmem:[#allocation5 + $0xb0] sm:$0xff]
    %v182 = vld [vmem:[#allocation5 + $0xb8] sm:$0xff]
    %v183 = vld [vmem:[#allocation5 + $0xc0] sm:$0xff]
    %v184 = vld [vmem:[#allocation5 + $0xc8] sm:$0xff]
    %v185 = vld [vmem:[#allocation5 + $0xd0] sm:$0xff]
    %v186 = vld [vmem:[#allocation5 + $0xd8] sm:$0xff]
    %v187 = vld [vmem:[#allocation5 + $0xe0] sm:$0xff]
    %v188 = vld [vmem:[#allocation5 + $0xe8] sm:$0xff]
    %v189 = vld [vmem:[#allocation5 + $0xf0] sm:$0xff]
    %v190 = vld [vmem:[#allocation5 + $0xf8] sm:$0xff]
    %v191 = vld [vmem:[#allocation5 + $0x100] sm:$0xff]
    %v192 = vmul.f32 %v167, %v176
    %v193 = vmul.f32 %v169, %v177
    %v194 = vmul.f32 %v172, %v178
    %v195 = vmul.f32 %v174, %v179
    %v196 = vmul.f32 %v167, %v180
    %v197 = vmul.f32 %v169, %v181
    %v198 = vmul.f32 %v172, %v182
    %v199 = vmul.f32 %v174, %v183
    %v200 = vmul.f32 %v167, %v184
    %v201 = vmul.f32 %v169, %v185
    %v202 = vmul.f32 %v172, %v186
    %v203 = vmul.f32 %v174, %v187
    %v204 = vmul.f32 %v167, %v188
    %v205 = vmul.f32 %v169, %v189
    %v206 = vmul.f32 %v172, %v190
    %v207 = vmul.f32 %v174, %v191
    %v208 = vpack.c.bf16 %v193, %v192
    %v209 = vpack.c.bf16 %v195, %v194
    %v210 = vpack.c.bf16 %v197, %v196
    %v211 = vpack.c.bf16 %v199, %v198
    %v212 = vpack.c.bf16 %v201, %v200
    %v213 = vpack.c.bf16 %v203, %v202
    %v214 = vpack.c.bf16 %v205, %v204
    %v215 = vpack.c.bf16 %v207, %v206
    %v216 = vpack.c.bf16 %v169, %v167
    %v217 = vpack.c.bf16 %v174, %v172
    %v218 = vld [vmem:[#allocation5 + $0x108] sm:$0xff]
    %v219 = vld [vmem:[#allocation5 + $0x110] sm:$0xff]
    %v220 = vld [vmem:[#allocation5 + $0x118] sm:$0xff]
    %v221 = vld [vmem:[#allocation5 + $0x120] sm:$0xff]
    %v222 = vld [vmem:[#allocation5 + $0x128] sm:$0xff]
    %v223 = vld [vmem:[#allocation5 + $0x130] sm:$0xff]
    %v224 = vld [vmem:[#allocation5 + $0x138] sm:$0xff]
    %v225 = vld [vmem:[#allocation5 + $0x140] sm:$0xff]
    %v226 = vld [vmem:[#allocation5 + $0x148] sm:$0xff]
    %v227 = vld [vmem:[#allocation5 + $0x150] sm:$0xff]
    %v228 = vld [vmem:[#allocation5 + $0x158] sm:$0xff]
    %v229 = vld [vmem:[#allocation5 + $0x160] sm:$0xff]
    %v230 = vld [vmem:[#allocation5 + $0x168] sm:$0xff]
    %v231 = vld [vmem:[#allocation5 + $0x170] sm:$0xff]
    %v232 = vld [vmem:[#allocation5 + $0x178] sm:$0xff]
    %v233 = vld [vmem:[#allocation5 + $0x180] sm:$0xff]
    %236 = vrot.lane.b32.xlu0 %v216, 112
    %v237 = vpop.permute.xlu0 %236
    %238 = vrot.lane.b32.xlu0 %v217, 112
    %v239 = vpop.permute.xlu0 %238
    %v241 = vsel %vm150, %v208, 0
    %v244 = vsel %vm150, %v209, 0
    %v247 = vsel %vm150, %v210, 0
    %v250 = vsel %vm150, %v211, 0
    %v253 = vsel %vm150, %v212, 0
    %v256 = vsel %vm150, %v213, 0
    %v259 = vsel %vm150, %v214, 0
    %v262 = vsel %vm150, %v215, 0
    %v265 = vsel %vm150, %v237, 0
    %v268 = vsel %vm150, %v239, 0
    %270 = vmatpush.bf16.xpose.msra.mxu0 0
    %271 = vmatpush.bf16.xpose.msra.mxu0 0
    %272 = vmatpush.bf16.xpose.msra.mxu0 0
    %273 = vmatpush.bf16.xpose.msra.mxu0 0
    %274 = vmatpush.bf16.xpose.msra.mxu0 0
    %275 = vmatpush.bf16.xpose.msra.mxu0 0
    %276 = vmatpush.bf16.xpose.msra.mxu0 %v268
    %277 = vmatpush.bf16.xpose.msra.mxu0 %v265
    %278 = vmatmul.bf16.gmra.mxu0 %v241
    %v279 = vpop.f32.mrf.mxu0
    %v280 = vadd.f32 %v218, %v279
    %v281 = vpop.f32.mrf.mxu0
    %v282 = vadd.f32 %v219, %v281
    %283 = vmatmul.bf16.gmra.mxu0 %v244
    %v284 = vpop.f32.mrf.mxu0
    %v285 = vadd.f32 %v220, %v284
    %v286 = vpop.f32.mrf.mxu0
    %v287 = vadd.f32 %v221, %v286
    %288 = vmatmul.bf16.gmra.mxu0 %v247
    %v289 = vpop.f32.mrf.mxu0
    %v290 = vadd.f32 %v222, %v289
    %v291 = vpop.f32.mrf.mxu0
    %v292 = vadd.f32 %v223, %v291
    %293 = vmatmul.bf16.gmra.mxu0 %v250
    %v294 = vpop.f32.mrf.mxu0
    %v295 = vadd.f32 %v224, %v294
    %v296 = vpop.f32.mrf.mxu0
    %v297 = vadd.f32 %v225, %v296
    %298 = vmatmul.bf16.gmra.mxu0 %v253
    %v299 = vpop.f32.mrf.mxu0
    %v300 = vadd.f32 %v226, %v299
    %v301 = vpop.f32.mrf.mxu0
    %v302 = vadd.f32 %v227, %v301
    %303 = vmatmul.bf16.gmra.mxu0 %v256
    %v304 = vpop.f32.mrf.mxu0
    %v305 = vadd.f32 %v228, %v304
    %v306 = vpop.f32.mrf.mxu0
    %v307 = vadd.f32 %v229, %v306
    %308 = vmatmul.bf16.gmra.mxu0 %v259
    %v309 = vpop.f32.mrf.mxu0
    %v310 = vadd.f32 %v230, %v309
    %v311 = vpop.f32.mrf.mxu0
    %v312 = vadd.f32 %v231, %v311
    %313 = vmatmul.bf16.gmra.mxu0 %v262
    %v314 = vpop.f32.mrf.mxu0
    %v315 = vadd.f32 %v232, %v314
    %v316 = vpop.f32.mrf.mxu0
    %v317 = vadd.f32 %v233, %v316
    %318 = vdwg.mxu0
    %vm319 = vcmask 261120
    %v320 = vsel %vm319, %v280, -inf
    %321 = vmax.xlane.f32.xlu0 %v320
    %v322 = vpop.xlane.xlu0 %321
    %v323 = vsel %vm319, %v282, -inf
    %324 = vmax.xlane.f32.xlu0 %v323
    %v325 = vpop.xlane.xlu0 %324
    %v326 = vsel %vm319, %v285, -inf
    %327 = vmax.xlane.f32.xlu0 %v326
    %v328 = vpop.xlane.xlu0 %327
    %v329 = vsel %vm319, %v287, -inf
    %330 = vmax.xlane.f32.xlu0 %v329
    %v331 = vpop.xlane.xlu0 %330
    %v332 = vsel %vm319, %v290, -inf
    %333 = vmax.xlane.f32.xlu0 %v332
    %v334 = vpop.xlane.xlu0 %333
    %v335 = vsel %vm319, %v292, -inf
    %336 = vmax.xlane.f32.xlu0 %v335
    %v337 = vpop.xlane.xlu0 %336
    %v338 = vsel %vm319, %v295, -inf
    %339 = vmax.xlane.f32.xlu0 %v338
    %v340 = vpop.xlane.xlu0 %339
    %v341 = vsel %vm319, %v297, -inf
    %342 = vmax.xlane.f32.xlu0 %v341
    %v343 = vpop.xlane.xlu0 %342
    %v344 = vsel %vm319, %v300, -inf
    %345 = vmax.xlane.f32.xlu0 %v344
    %v346 = vpop.xlane.xlu0 %345
    %v347 = vsel %vm319, %v302, -inf
    %348 = vmax.xlane.f32.xlu0 %v347
    %v349 = vpop.xlane.xlu0 %348
    %v350 = vsel %vm319, %v305, -inf
    %351 = vmax.xlane.f32.xlu0 %v350
    %v352 = vpop.xlane.xlu0 %351
    %v353 = vsel %vm319, %v307, -inf
    %354 = vmax.xlane.f32.xlu0 %v353
    %v355 = vpop.xlane.xlu0 %354
    %v356 = vsel %vm319, %v310, -inf
    %357 = vmax.xlane.f32.xlu0 %v356
    %v358 = vpop.xlane.xlu0 %357
    %v359 = vsel %vm319, %v312, -inf
    %360 = vmax.xlane.f32.xlu0 %v359
    %v361 = vpop.xlane.xlu0 %360
    %v362 = vsel %vm319, %v315, -inf
    %363 = vmax.xlane.f32.xlu0 %v362
    %v364 = vpop.xlane.xlu0 %363
    %v365 = vsel %vm319, %v317, -inf
    %366 = vmax.xlane.f32.xlu0 %v365
    %v367 = vpop.xlane.xlu0 %366
    %v368 = vsub.f32 %v280, %v322
    %v369 = vsub.f32 %v282, %v325
    %v370 = vsub.f32 %v285, %v328
    %v371 = vsub.f32 %v287, %v331
    %v372 = vsub.f32 %v290, %v334
    %v373 = vsub.f32 %v292, %v337
    %v374 = vsub.f32 %v295, %v340
    %v375 = vsub.f32 %v297, %v343
    %v376 = vsub.f32 %v300, %v346
    %v377 = vsub.f32 %v302, %v349
    %v378 = vsub.f32 %v305, %v352
    %v379 = vsub.f32 %v307, %v355
    %v380 = vsub.f32 %v310, %v358
    %v381 = vsub.f32 %v312, %v361
    %v382 = vsub.f32 %v315, %v364
    %v383 = vsub.f32 %v317, %v367
    %v384 = vmul.f32 %v368, 1.442695
    %v385 = vpow.pop %v384
    %v386 = vmul.f32 %v369, 1.442695
    %v387 = vpow.pop %v386
    %v388 = vmul.f32 %v370, 1.442695
    %v389 = vpow.pop %v388
    %v390 = vmul.f32 %v371, 1.442695
    %v391 = vpow.pop %v390
    %v392 = vmul.f32 %v372, 1.442695
    %v393 = vpow.pop %v392
    %v394 = vmul.f32 %v373, 1.442695
    %v395 = vpow.pop %v394
    %v396 = vmul.f32 %v374, 1.442695
    %v397 = vpow.pop %v396
    %v398 = vmul.f32 %v375, 1.442695
    %v399 = vpow.pop %v398
    %v400 = vmul.f32 %v376, 1.442695
    %v401 = vpow.pop %v400
    %v402 = vmul.f32 %v377, 1.442695
    %v403 = vpow.pop %v402
    %v404 = vmul.f32 %v378, 1.442695
    %v405 = vpow.pop %v404
    %v406 = vmul.f32 %v379, 1.442695
    %v407 = vpow.pop %v406
    %v408 = vmul.f32 %v380, 1.442695
    %v409 = vpow.pop %v408
    %v410 = vmul.f32 %v381, 1.442695
    %v411 = vpow.pop %v410
    %v412 = vmul.f32 %v382, 1.442695
    %v413 = vpow.pop %v412
    %v414 = vmul.f32 %v383, 1.442695
    %v415 = vpow.pop %v414
    %v416 = vsel %vm319, %v385, 0.0
    %417 = vadd.xlane.f32.xlu0 %v416
    %v418 = vpop.xlane.xlu0 %417
    %v419 = vsel %vm319, %v387, 0.0
    %420 = vadd.xlane.f32.xlu0 %v419
    %v421 = vpop.xlane.xlu0 %420
    %v422 = vsel %vm319, %v389, 0.0
    %423 = vadd.xlane.f32.xlu0 %v422
    %v424 = vpop.xlane.xlu0 %423
    %v425 = vsel %vm319, %v391, 0.0
    %426 = vadd.xlane.f32.xlu0 %v425
    %v427 = vpop.xlane.xlu0 %426
    %v428 = vsel %vm319, %v393, 0.0
    %429 = vadd.xlane.f32.xlu0 %v428
    %v430 = vpop.xlane.xlu0 %429
    %v431 = vsel %vm319, %v395, 0.0
    %432 = vadd.xlane.f32.xlu0 %v431
    %v433 = vpop.xlane.xlu0 %432
    %v434 = vsel %vm319, %v397, 0.0
    %435 = vadd.xlane.f32.xlu0 %v434
    %v436 = vpop.xlane.xlu0 %435
    %v437 = vsel %vm319, %v399, 0.0
    %438 = vadd.xlane.f32.xlu0 %v437
    %v439 = vpop.xlane.xlu0 %438
    %v440 = vsel %vm319, %v401, 0.0
    %441 = vadd.xlane.f32.xlu0 %v440
    %v442 = vpop.xlane.xlu0 %441
    %v443 = vsel %vm319, %v403, 0.0
    %444 = vadd.xlane.f32.xlu0 %v443
    %v445 = vpop.xlane.xlu0 %444
    %v446 = vsel %vm319, %v405, 0.0
    %447 = vadd.xlane.f32.xlu0 %v446
    %v448 = vpop.xlane.xlu0 %447
    %v449 = vsel %vm319, %v407, 0.0
    %450 = vadd.xlane.f32.xlu0 %v449
    %v451 = vpop.xlane.xlu0 %450
    %v452 = vsel %vm319, %v409, 0.0
    %453 = vadd.xlane.f32.xlu0 %v452
    %v454 = vpop.xlane.xlu0 %453
    %v455 = vsel %vm319, %v411, 0.0
    %456 = vadd.xlane.f32.xlu0 %v455
    %v457 = vpop.xlane.xlu0 %456
    %v458 = vsel %vm319, %v413, 0.0
    %459 = vadd.xlane.f32.xlu0 %v458
    %v460 = vpop.xlane.xlu0 %459
    %v461 = vsel %vm319, %v415, 0.0
    %462 = vadd.xlane.f32.xlu0 %v461
    %v463 = vpop.xlane.xlu0 %462
    %v464 = vrcp.pop %v418
    %v465 = vrcp.pop %v421
    %v466 = vrcp.pop %v424
    %v467 = vrcp.pop %v427
    %v468 = vrcp.pop %v430
    %v469 = vrcp.pop %v433
    %v470 = vrcp.pop %v436
    %v471 = vrcp.pop %v439
    %v472 = vrcp.pop %v442
    %v473 = vrcp.pop %v445
    %v474 = vrcp.pop %v448
    %v475 = vrcp.pop %v451
    %v476 = vrcp.pop %v454
    %v477 = vrcp.pop %v457
    %v478 = vrcp.pop %v460
    %v479 = vrcp.pop %v463
    %v480 = vmul.f32 %v385, %v464
    %v481 = vmul.f32 %v387, %v465
    %v482 = vmul.f32 %v389, %v466
    %v483 = vmul.f32 %v391, %v467
    %v484 = vmul.f32 %v393, %v468
    %v485 = vmul.f32 %v395, %v469
    %v486 = vmul.f32 %v397, %v470
    %v487 = vmul.f32 %v399, %v471
    %v488 = vmul.f32 %v401, %v472
    %v489 = vmul.f32 %v403, %v473
    %v490 = vmul.f32 %v405, %v474
    %v491 = vmul.f32 %v407, %v475
    %v492 = vmul.f32 %v409, %v476
    %v493 = vmul.f32 %v411, %v477
    %v494 = vmul.f32 %v413, %v478
    %v495 = vmul.f32 %v415, %v479
    %v496 = vpack.c.bf16 %v481, %v480
    %v497 = vpack.c.bf16 %v483, %v482
    %v498 = vpack.c.bf16 %v485, %v484
    %v499 = vpack.c.bf16 %v487, %v486
    %v500 = vpack.c.bf16 %v489, %v488
    %v501 = vpack.c.bf16 %v491, %v490
    %v502 = vpack.c.bf16 %v493, %v492
    %v503 = vpack.c.bf16 %v495, %v494
    %504 = vrot.lane.b32.xlu0 %v216, 96
    %v505 = vpop.permute.xlu0 %504
    %506 = vrot.lane.b32.xlu0 %v217, 96
    %v507 = vpop.permute.xlu0 %506
    %v511 = vsel %vm319, %v496, 0
    %v514 = vsel %vm319, %v497, 0
    %v517 = vsel %vm319, %v498, 0
    %v520 = vsel %vm319, %v499, 0
    %v523 = vsel %vm319, %v500, 0
    %v526 = vsel %vm319, %v501, 0
    %v529 = vsel %vm319, %v502, 0
    %v532 = vsel %vm319, %v503, 0
    %534 = vmatpush.bf16.msra.mxu0 0
    %535 = vmatpush.bf16.msra.mxu0 0
    %536 = vmatpush.bf16.msra.mxu0 0
    %537 = vmatpush.bf16.msra.mxu0 0
    %538 = vmatpush.bf16.msra.mxu0 0
    %539 = vmatpush.bf16.msra.mxu0 0
    %540 = vmatpush.bf16.msra.mxu0 %v507
    %541 = vmatpush.bf16.msra.mxu0 %v505
    %542 = vmatmul.bf16.gmra.mxu0 %v511
    %v543 = vpop.f32.mrf.mxu0
    %v544 = vadd.f32 0.0, %v543
    %v545 = vpop.f32.mrf.mxu0
    %v546 = vadd.f32 0.0, %v545
    %547 = vmatmul.bf16.gmra.mxu0 %v514
    %v548 = vpop.f32.mrf.mxu0
    %v549 = vadd.f32 0.0, %v548
    %v550 = vpop.f32.mrf.mxu0
    %v551 = vadd.f32 0.0, %v550
    %552 = vmatmul.bf16.gmra.mxu0 %v517
    %v553 = vpop.f32.mrf.mxu0
    %v554 = vadd.f32 0.0, %v553
    %v555 = vpop.f32.mrf.mxu0
    %v556 = vadd.f32 0.0, %v555
    %557 = vmatmul.bf16.gmra.mxu0 %v520
    %v558 = vpop.f32.mrf.mxu0
    %v559 = vadd.f32 0.0, %v558
    %v560 = vpop.f32.mrf.mxu0
    %v561 = vadd.f32 0.0, %v560
    %562 = vmatmul.bf16.gmra.mxu0 %v523
    %v563 = vpop.f32.mrf.mxu0
    %v564 = vadd.f32 0.0, %v563
    %v565 = vpop.f32.mrf.mxu0
    %v566 = vadd.f32 0.0, %v565
    %567 = vmatmul.bf16.gmra.mxu0 %v526
    %v568 = vpop.f32.mrf.mxu0
    %v569 = vadd.f32 0.0, %v568
    %v570 = vpop.f32.mrf.mxu0
    %v571 = vadd.f32 0.0, %v570
    %572 = vmatmul.bf16.gmra.mxu0 %v529
    %v573 = vpop.f32.mrf.mxu0
    %v574 = vadd.f32 0.0, %v573
    %v575 = vpop.f32.mrf.mxu0
    %v576 = vadd.f32 0.0, %v575
    %577 = vmatmul.bf16.gmra.mxu0 %v532
    %v578 = vpop.f32.mrf.mxu0
    %v579 = vadd.f32 0.0, %v578
    %v580 = vpop.f32.mrf.mxu0
    %v581 = vadd.f32 0.0, %v580
    %582 = vdwg.mxu0
    %v583 = vmul.f32 %v544, %v176
    %v584 = vmul.f32 %v546, %v177
    %v585 = vmul.f32 %v549, %v178
    %v586 = vmul.f32 %v551, %v179
    %v587 = vmul.f32 %v554, %v180
    %v588 = vmul.f32 %v556, %v181
    %v589 = vmul.f32 %v559, %v182
    %v590 = vmul.f32 %v561, %v183
    %v591 = vmul.f32 %v564, %v184
    %v592 = vmul.f32 %v566, %v185
    %v593 = vmul.f32 %v569, %v186
    %v594 = vmul.f32 %v571, %v187
    %v595 = vmul.f32 %v574, %v188
    %v596 = vmul.f32 %v576, %v189
    %v597 = vmul.f32 %v579, %v190
    %v598 = vmul.f32 %v581, %v191
    %v599 = vld [vmem:[#allocation2 + $0x158] sm:$0xf]
    %v600 = vld [vmem:[#allocation2 + $0x15c] sm:$0xf]
    %v601 = vld [vmem:[#allocation2 + $0x160] sm:$0xf]
    %v602 = vld [vmem:[#allocation2 + $0x164] sm:$0xf]
    %v603 = vpack.c.bf16 %v584, %v583
    %v604 = vpack.c.bf16 %v586, %v585
    %v605 = vpack.c.bf16 %v588, %v587
    %v606 = vpack.c.bf16 %v590, %v589
    %v607 = vpack.c.bf16 %v592, %v591
    %v608 = vpack.c.bf16 %v594, %v593
    %v609 = vpack.c.bf16 %v596, %v595
    %v610 = vpack.c.bf16 %v598, %v597
    %v615 = vunpack.c.l.b16 %v599
    %v616 = vunpack.c.l.b16 %v600
    %v617 = vunpack.c.l.b16 %v601
    %v618 = vunpack.c.l.b16 %v602
    %v619 = vpack.c.b16 %v616, %v615
    %v620 = vpack.c.b16 %v618, %v617
    %623 = vmatpush.bf16.msra.mxu0 %v610
    %624 = vmatpush.bf16.msra.mxu0 %v609
    %625 = vmatpush.bf16.msra.mxu0 %v608
    %626 = vmatpush.bf16.msra.mxu0 %v607
    %627 = vmatpush.bf16.msra.mxu0 %v606
    %628 = vmatpush.bf16.msra.mxu0 %v605
    %629 = vmatpush.bf16.msra.mxu0 %v604
    %630 = vmatpush.bf16.msra.mxu0 %v603
    %631 = vmatmul.bf16.gmra.mxu0 %v619
    %v632 = vpop.f32.mrf.mxu0
    %v633 = vadd.f32 0.0, %v632
    %v634 = vpop.f32.mrf.mxu0
    %v635 = vadd.f32 0.0, %v634
    %636 = vmatmul.bf16.gmra.mxu0 %v620
    %v637 = vpop.f32.mrf.mxu0
    %v638 = vadd.f32 0.0, %v637
    %v639 = vpop.f32.mrf.mxu0
    %v640 = vadd.f32 0.0, %v639
    %641 = vdwg.mxu0
    %v642 = vld [vmem:[#allocation2 + $0x8] sm:$0xf]
    %v643 = vld [vmem:[#allocation2 + $0xc] sm:$0xf]
    %v644 = vpack.c.bf16 %v635, %v633
    %v645 = vpack.c.bf16 %v640, %v638
    %v646 = vld [vmem:[#allocation5 + $0x30] sm:$0x1]
    %v647 = vperm.slane %v646, 0
    %v650 = vunpack.c.l.b16 %v642
    %v651 = vunpack.c.l.b16 %v643
    %v652 = vpack.c.b16 %v651, %v650
    %v655 = vsel %vm150, %v644, 0
    %v658 = vsel %vm150, %v645, 0
    %660 = vmatpush.bf16.msra.mxu0 0
    %661 = vmatpush.bf16.msra.mxu0 0
    %662 = vmatpush.bf16.msra.mxu0 0
    %663 = vmatpush.bf16.msra.mxu0 0
    %664 = vmatpush.bf16.msra.mxu0 0
    %665 = vmatpush.bf16.msra.mxu0 0
    %666 = vmatpush.bf16.msra.mxu0 0
    %667 = vmatpush.bf16.msra.mxu0 %v652
    %668 = vmatmul.bf16.gmra.mxu0 %v655
    %v669 = vpop.f32.mrf.mxu0
    %v670 = vadd.f32 %v647, %v669
    %v671 = vpop.f32.mrf.mxu0
    %v672 = vadd.f32 %v647, %v671
    %673 = vmatmul.bf16.gmra.mxu0 %v658
    %v674 = vpop.f32.mrf.mxu0
    %v675 = vadd.f32 %v647, %v674
    %v676 = vpop.f32.mrf.mxu0
    %v677 = vadd.f32 %v647, %v676
    %678 = vdwg.mxu0
    %v679 = vadd.f32 %v129, %v670
    %v680 = vadd.f32 %v131, %v672
    %v681 = vadd.f32 %v134, %v675
    %v682 = vadd.f32 %v136, %v677
    %v683 = vld [vmem:[#allocation5 + $0x38] sm:$0x1]
    %v684 = vld [vmem:[#allocation5 + $0x40] sm:$0x1]
    %v685 = vsel %vm150, %v679, 0.0
    %686 = vadd.xlane.f32.xlu0 %v685
    %v687 = vpop.xlane.xlu0 %686
    %v688 = vsel %vm150, %v680, 0.0
    %689 = vadd.xlane.f32.xlu0 %v688
    %v690 = vpop.xlane.xlu0 %689
    %v691 = vsel %vm150, %v681, 0.0
    %692 = vadd.xlane.f32.xlu0 %v691
    %v693 = vpop.xlane.xlu0 %692
    %v694 = vsel %vm150, %v682, 0.0
    %695 = vadd.xlane.f32.xlu0 %v694
    %v696 = vpop.xlane.xlu0 %695
    %v697 = vrcp.pop 16.0
    %v698 = vmul.f32 16.0, %v697
    %v699 = vsub.f32 1.0, %v698
    %v700 = vmul.f32 %v697, %v699
    %v701 = vadd.f32 %v697, %v700
    %vm702 = vweird.f32 %v697
    %v703 = vsel %vm702, %v697, %v701
    %v704 = vmul.f32 %v687, %v703
    %v705 = vmul.f32 %v690, %v703
    %v706 = vmul.f32 %v693, %v703
    %v707 = vmul.f32 %v696, %v703
    %v708 = vsub.f32 %v679, %v704
    %v709 = vsub.f32 %v680, %v705
    %v710 = vsub.f32 %v681, %v706
    %v711 = vsub.f32 %v682, %v707
    %v712 = vmul.f32 %v708, %v708
    %v713 = vmul.f32 %v709, %v709
    %v714 = vmul.f32 %v710, %v710
    %v715 = vmul.f32 %v711, %v711
    %v716 = vsel %vm150, %v712, 0.0
    %717 = vadd.xlane.f32.xlu0 %v716
    %v718 = vpop.xlane.xlu0 %717
    %v719 = vsel %vm150, %v713, 0.0
    %720 = vadd.xlane.f32.xlu0 %v719
    %v721 = vpop.xlane.xlu0 %720
    %v722 = vsel %vm150, %v714, 0.0
    %723 = vadd.xlane.f32.xlu0 %v722
    %v724 = vpop.xlane.xlu0 %723
    %v725 = vsel %vm150, %v715, 0.0
    %726 = vadd.xlane.f32.xlu0 %v725
    %v727 = vpop.xlane.xlu0 %726
    %v728 = vmul.f32 %v718, %v703
    %v729 = vmul.f32 %v721, %v703
    %v730 = vmul.f32 %v724, %v703
    %v731 = vmul.f32 %v727, %v703
    %v732 = vadd.f32 %v728, 1e-05
    %v733 = vadd.f32 %v729, 1e-05
    %v734 = vadd.f32 %v730, 1e-05
    %v735 = vadd.f32 %v731, 1e-05
    %v736 = vrsqrt.pop %v732
    %v737 = vmul.f32 %v736, %v732
    %v738 = vmul.f32 %v737, %v736
    %v739 = vmul.f32 0.5, %v738
    %v740 = vsub.f32 1.5, %v739
    %v741 = vmul.f32 %v736, %v740
    %vm742 = vweird.f32 %v732
    %vm743 = vweird.f32 %v736
    %vm744 = vmor %vm742, %vm743
    %v745 = vsel %vm744, %v736, %v741
    %v746 = vrsqrt.pop %v733
    %v747 = vmul.f32 %v746, %v733
    %v748 = vmul.f32 %v747, %v746
    %v749 = vmul.f32 0.5, %v748
    %v750 = vsub.f32 1.5, %v749
    %v751 = vmul.f32 %v746, %v750
    %vm752 = vweird.f32 %v733
    %vm753 = vweird.f32 %v746
    %vm754 = vmor %vm752, %vm753
    %v755 = vsel %vm754, %v746, %v751
    %v756 = vrsqrt.pop %v734
    %v757 = vmul.f32 %v756, %v734
    %v758 = vmul.f32 %v757, %v756
    %v759 = vmul.f32 0.5, %v758
    %v760 = vsub.f32 1.5, %v759
    %v761 = vmul.f32 %v756, %v760
    %vm762 = vweird.f32 %v734
    %vm763 = vweird.f32 %v756
    %vm764 = vmor %vm762, %vm763
    %v765 = vsel %vm764, %v756, %v761
    %v766 = vrsqrt.pop %v735
    %v767 = vmul.f32 %v766, %v735
    %v768 = vmul.f32 %v767, %v766
    %v769 = vmul.f32 0.5, %v768
    %v770 = vsub.f32 1.5, %v769
    %v771 = vmul.f32 %v766, %v770
    %vm772 = vweird.f32 %v735
    %vm773 = vweird.f32 %v766
    %vm774 = vmor %vm772, %vm773
    %v775 = vsel %vm774, %v766, %v771
    %v776 = vmul.f32 %v708, %v745
    %v777 = vmul.f32 %v709, %v755
    %v778 = vmul.f32 %v710, %v765
    %v779 = vmul.f32 %v711, %v775
    %v780 = vperm.slane %v683, 0
    %v781 = vmul.f32 %v776, %v780
    %v782 = vmul.f32 %v777, %v780
    %v783 = vmul.f32 %v778, %v780
    %v784 = vmul.f32 %v779, %v780
    %v785 = vperm.slane %v684, 0
    %v786 = vadd.f32 %v781, %v785
    %v787 = vadd.f32 %v782, %v785
    %v788 = vadd.f32 %v783, %v785
    %v789 = vadd.f32 %v784, %v785
    %v790 = vld [vmem:[#allocation2 + $0x10] sm:$0xf]
    %v791 = vld [vmem:[#allocation2 + $0x14] sm:$0xf]
    %v792 = vpack.c.bf16 %v787, %v786
    %v793 = vpack.c.bf16 %v789, %v788
    %v794 = vld [vmem:[#allocation5 + $0x58] sm:$0x1]
    %v795 = vperm.slane %v794, 0
    %v798 = vunpack.c.l.b16 %v790
    %v799 = vunpack.c.l.b16 %v791
    %v800 = vpack.c.b16 %v799, %v798
    %v803 = vsel %vm150, %v792, 0
    %v806 = vsel %vm150, %v793, 0
    %808 = vmatpush.bf16.msra.mxu0 0
    %809 = vmatpush.bf16.msra.mxu0 0
    %810 = vmatpush.bf16.msra.mxu0 0
    %811 = vmatpush.bf16.msra.mxu0 0
    %812 = vmatpush.bf16.msra.mxu0 0
    %813 = vmatpush.bf16.msra.mxu0 0
    %814 = vmatpush.bf16.msra.mxu0 0
    %815 = vmatpush.bf16.msra.mxu0 %v800
    %816 = vmatmul.bf16.gmra.mxu0 %v803
    %v817 = vpop.f32.mrf.mxu0
    %v818 = vadd.f32 %v795, %v817
    %v819 = vpop.f32.mrf.mxu0
    %v820 = vadd.f32 %v795, %v819
    %821 = vmatmul.bf16.gmra.mxu0 %v806
    %v822 = vpop.f32.mrf.mxu0
    %v823 = vadd.f32 %v795, %v822
    %v824 = vpop.f32.mrf.mxu0
    %v825 = vadd.f32 %v795, %v824
    %826 = vdwg.mxu0
    %v827 = vmax.f32 %v818, 0.0
    %v828 = vmax.f32 %v820, 0.0
    %v829 = vmax.f32 %v823, 0.0
    %v830 = vmax.f32 %v825, 0.0
    %v831 = vld [vmem:[#allocation2 + $0x18] sm:$0xf]
    %v832 = vld [vmem:[#allocation2 + $0x1c] sm:$0xf]
    %v833 = vld [vmem:[#allocation2 + $0x20] sm:$0xf]
    %v834 = vld [vmem:[#allocation2 + $0x24] sm:$0xf]
    %v835 = vld [vmem:[#allocation2 + $0x28] sm:$0xf]
    %v836 = vld [vmem:[#allocation2 + $0x2c] sm:$0xf]
    %v837 = vld [vmem:[#allocation2 + $0x30] sm:$0xf]
    %v838 = vld [vmem:[#allocation2 + $0x34] sm:$0xf]
    %v839 = vld [vmem:[#allocation2 + $0x38] sm:$0xf]
    %v840 = vld [vmem:[#allocation2 + $0x3c] sm:$0xf]
    %v841 = vld [vmem:[#allocation2 + $0x40] sm:$0xf]
    %v842 = vld [vmem:[#allocation2 + $0x44] sm:$0xf]
    %v843 = vld [vmem:[#allocation2 + $0x48] sm:$0xf]
    %v844 = vld [vmem:[#allocation2 + $0x4c] sm:$0xf]
    %v845 = vld [vmem:[#allocation2 + $0x50] sm:$0xf]
    %v846 = vld [vmem:[#allocation2 + $0x54] sm:$0xf]
    %v847 = vpack.c.bf16 %v828, %v827
    %v848 = vpack.c.bf16 %v830, %v829
    %v849 = vld [vmem:[#allocation5 + $0x60] sm:$0x1]
    %v850 = vperm.slane %v849, 0
    %v867 = vunpack.c.l.b16 %v831
    %v868 = vunpack.c.l.b16 %v832
    %v869 = vunpack.c.l.b16 %v833
    %v870 = vunpack.c.l.b16 %v834
    %v871 = vunpack.c.l.b16 %v835
    %v872 = vunpack.c.l.b16 %v836
    %v873 = vunpack.c.l.b16 %v837
    %v874 = vunpack.c.l.b16 %v838
    %v875 = vunpack.c.l.b16 %v839
    %v876 = vunpack.c.l.b16 %v840
    %v877 = vunpack.c.l.b16 %v841
    %v878 = vunpack.c.l.b16 %v842
    %v879 = vunpack.c.l.b16 %v843
    %v880 = vunpack.c.l.b16 %v844
    %v881 = vunpack.c.l.b16 %v845
    %v882 = vunpack.c.l.b16 %v846
    %v883 = vpack.c.b16 %v868, %v867
    %v884 = vpack.c.b16 %v870, %v869
    %v885 = vpack.c.b16 %v872, %v871
    %v886 = vpack.c.b16 %v874, %v873
    %v887 = vpack.c.b16 %v876, %v875
    %v888 = vpack.c.b16 %v878, %v877
    %v889 = vpack.c.b16 %v880, %v879
    %v890 = vpack.c.b16 %v882, %v881
    %899 = vmatpush.bf16.msra.mxu0 %v890
    %900 = vmatpush.bf16.msra.mxu0 %v889
    %901 = vmatpush.bf16.msra.mxu0 %v888
    %902 = vmatpush.bf16.msra.mxu0 %v887
    %903 = vmatpush.bf16.msra.mxu0 %v886
    %904 = vmatpush.bf16.msra.mxu0 %v885
    %905 = vmatpush.bf16.msra.mxu0 %v884
    %906 = vmatpush.bf16.msra.mxu0 %v883
    %907 = vmatmul.bf16.gmra.mxu0 %v847
    %v908 = vpop.f32.mrf.mxu0
    %v909 = vadd.f32 %v850, %v908
    %v910 = vpop.f32.mrf.mxu0
    %v911 = vadd.f32 %v850, %v910
    %912 = vmatmul.bf16.gmra.mxu0 %v848
    %v913 = vpop.f32.mrf.mxu0
    %v914 = vadd.f32 %v850, %v913
    %v915 = vpop.f32.mrf.mxu0
    %v916 = vadd.f32 %v850, %v915
    %917 = vdwg.mxu0
    %v918 = vadd.f32 %v786, %v909
    %v919 = vadd.f32 %v787, %v911
    %v920 = vadd.f32 %v788, %v914
    %v921 = vadd.f32 %v789, %v916
    %v922 = vld [vmem:[#allocation5 + $0x48] sm:$0x1]
    %v923 = vld [vmem:[#allocation5 + $0x50] sm:$0x1]
    %v924 = vsel %vm150, %v918, 0.0
    %925 = vadd.xlane.f32.xlu0 %v924
    %v926 = vpop.xlane.xlu0 %925
    %v927 = vsel %vm150, %v919, 0.0
    %928 = vadd.xlane.f32.xlu0 %v927
    %v929 = vpop.xlane.xlu0 %928
    %v930 = vsel %vm150, %v920, 0.0
    %931 = vadd.xlane.f32.xlu0 %v930
    %v932 = vpop.xlane.xlu0 %931
    %v933 = vsel %vm150, %v921, 0.0
    %934 = vadd.xlane.f32.xlu0 %v933
    %v935 = vpop.xlane.xlu0 %934
    %v936 = vmul.f32 %v926, %v703
    %v937 = vmul.f32 %v929, %v703
    %v938 = vmul.f32 %v932, %v703
    %v939 = vmul.f32 %v935, %v703
    %v940 = vsub.f32 %v918, %v936
    %v941 = vsub.f32 %v919, %v937
    %v942 = vsub.f32 %v920, %v938
    %v943 = vsub.f32 %v921, %v939
    %v944 = vmul.f32 %v940, %v940
    %v945 = vmul.f32 %v941, %v941
    %v946 = vmul.f32 %v942, %v942
    %v947 = vmul.f32 %v943, %v943
    %v948 = vsel %vm150, %v944, 0.0
    %949 = vadd.xlane.f32.xlu0 %v948
    %v950 = vpop.xlane.xlu0 %949
    %v951 = vsel %vm150, %v945, 0.0
    %952 = vadd.xlane.f32.xlu0 %v951
    %v953 = vpop.xlane.xlu0 %952
    %v954 = vsel %vm150, %v946, 0.0
    %955 = vadd.xlane.f32.xlu0 %v954
    %v956 = vpop.xlane.xlu0 %955
    %v957 = vsel %vm150, %v947, 0.0
    %958 = vadd.xlane.f32.xlu0 %v957
    %v959 = vpop.xlane.xlu0 %958
    %v960 = vmul.f32 %v950, %v703
    %v961 = vmul.f32 %v953, %v703
    %v962 = vmul.f32 %v956, %v703
    %v963 = vmul.f32 %v959, %v703
    %v964 = vadd.f32 %v960, 1e-05
    %v965 = vadd.f32 %v961, 1e-05
    %v966 = vadd.f32 %v962, 1e-05
    %v967 = vadd.f32 %v963, 1e-05
    %v968 = vrsqrt.pop %v964
    %v969 = vmul.f32 %v968, %v964
    %v970 = vmul.f32 %v969, %v968
    %v971 = vmul.f32 0.5, %v970
    %v972 = vsub.f32 1.5, %v971
    %v973 = vmul.f32 %v968, %v972
    %vm974 = vweird.f32 %v964
    %vm975 = vweird.f32 %v968
    %vm976 = vmor %vm974, %vm975
    %v977 = vsel %vm976, %v968, %v973
    %v978 = vrsqrt.pop %v965
    %v979 = vmul.f32 %v978, %v965
    %v980 = vmul.f32 %v979, %v978
    %v981 = vmul.f32 0.5, %v980
    %v982 = vsub.f32 1.5, %v981
    %v983 = vmul.f32 %v978, %v982
    %vm984 = vweird.f32 %v965
    %vm985 = vweird.f32 %v978
    %vm986 = vmor %vm984, %vm985
    %v987 = vsel %vm986, %v978, %v983
    %v988 = vrsqrt.pop %v966
    %v989 = vmul.f32 %v988, %v966
    %v990 = vmul.f32 %v989, %v988
    %v991 = vmul.f32 0.5, %v990
    %v992 = vsub.f32 1.5, %v991
    %v993 = vmul.f32 %v988, %v992
    %vm994 = vweird.f32 %v966
    %vm995 = vweird.f32 %v988
    %vm996 = vmor %vm994, %vm995
    %v997 = vsel %vm996, %v988, %v993
    %v998 = vrsqrt.pop %v967
    %v999 = vmul.f32 %v998, %v967
    %v1000 = vmul.f32 %v999, %v998
    %v1001 = vmul.f32 0.5, %v1000
    %v1002 = vsub.f32 1.5, %v1001
    %v1003 = vmul.f32 %v998, %v1002
    %vm1004 = vweird.f32 %v967
    %vm1005 = vweird.f32 %v998
    %vm1006 = vmor %vm1004, %vm1005
    %v1007 = vsel %vm1006, %v998, %v1003
    %v1008 = vmul.f32 %v940, %v977
    %v1009 = vmul.f32 %v941, %v987
    %v1010 = vmul.f32 %v942, %v997
    %v1011 = vmul.f32 %v943, %v1007
    %v1012 = vperm.slane %v922, 0
    %v1013 = vmul.f32 %v1008, %v1012
    %v1014 = vmul.f32 %v1009, %v1012
    %v1015 = vmul.f32 %v1010, %v1012
    %v1016 = vmul.f32 %v1011, %v1012
    %v1017 = vperm.slane %v923, 0
    %v1018 = vadd.f32 %v1013, %v1017
    %v1019 = vadd.f32 %v1014, %v1017
    %v1020 = vadd.f32 %v1015, %v1017
    %v1021 = vadd.f32 %v1016, %v1017
    %v1022 = vld [vmem:[#allocation2 + $0x170] sm:$0xf]
    %v1023 = vld [vmem:[#allocation2 + $0x174] sm:$0xf]
    %v1024 = vpack.c.bf16 %v1019, %v1018
    %v1025 = vpack.c.bf16 %v1021, %v1020
    %v1028 = vunpack.c.l.b16 %v1022
    %v1029 = vunpack.c.l.b16 %v1023
    %v1030 = vpack.c.b16 %v1029, %v1028
    %v1033 = vsel %vm150, %v1024, 0
    %v1036 = vsel %vm150, %v1025, 0
    %1038 = vmatpush.bf16.msra.mxu0 0
    %1039 = vmatpush.bf16.msra.mxu0 0
    %1040 = vmatpush.bf16.msra.mxu0 0
    %1041 = vmatpush.bf16.msra.mxu0 0
    %1042 = vmatpush.bf16.msra.mxu0 0
    %1043 = vmatpush.bf16.msra.mxu0 0
    %1044 = vmatpush.bf16.msra.mxu0 0
    %1045 = vmatpush.bf16.msra.mxu0 %v1030
    %1046 = vmatmul.bf16.gmra.mxu0 %v1033
    %v1047 = vpop.f32.mrf.mxu0
    %v1048 = vadd.f32 0.0, %v1047
    %v1049 = vpop.f32.mrf.mxu0
    %v1050 = vadd.f32 0.0, %v1049
    %1051 = vmatmul.bf16.gmra.mxu0 %v1036
    %v1052 = vpop.f32.mrf.mxu0
    %v1053 = vadd.f32 0.0, %v1052
    %v1054 = vpop.f32.mrf.mxu0
    %v1055 = vadd.f32 0.0, %v1054
    %1056 = vdwg.mxu0
    %v1057 = vld [vmem:[#allocation5 + $0x188] sm:$0xff]
    %v1058 = vld [vmem:[#allocation5 + $0x190] sm:$0xff]
    %v1059 = vld [vmem:[#allocation5 + $0x198] sm:$0xff]
    %v1060 = vld [vmem:[#allocation5 + $0x1a0] sm:$0xff]
    %v1061 = vmul.f32 %v1048, %v1057
    %v1062 = vmul.f32 %v1050, %v1058
    %v1063 = vmul.f32 %v1053, %v1059
    %v1064 = vmul.f32 %v1055, %v1060
    %v1065 = vld [vmem:[#allocation5 + $0x1a8] sm:$0xff]
    %v1066 = vld [vmem:[#allocation5 + $0x1b0] sm:$0xff]
    %v1067 = vld [vmem:[#allocation5 + $0x1b8] sm:$0xff]
    %v1068 = vld [vmem:[#allocation5 + $0x1c0] sm:$0xff]
    %v1069 = vmul.f32 %v1048, %v1065
    %v1070 = vmul.f32 %v1050, %v1066
    %v1071 = vmul.f32 %v1053, %v1067
    %v1072 = vmul.f32 %v1055, %v1068
    %v1073 = vld [vmem:[#allocation2 + $0x168] sm:$0x1]
    %v1074 = vpack.c.bf16 %v1062, %v1061
    %v1075 = vpack.c.bf16 %v1070, %v1069
    %v1076 = vpack.c.bf16 %v1064, %v1063
    %v1077 = vpack.c.bf16 %v1072, %v1071
    %v1079 = vsel %vm319, %v1073, 0
    %1081 = vmatpush.bf16.msra.mxu0 0
    %1082 = vmatpush.bf16.msra.mxu0 0
    %1083 = vmatpush.bf16.msra.mxu0 0
    %1084 = vmatpush.bf16.msra.mxu0 0
    %1085 = vmatpush.bf16.msra.mxu0 0
    %1086 = vmatpush.bf16.msra.mxu0 0
    %1087 = vmatpush.bf16.msra.mxu0 %v1076
    %1088 = vmatpush.bf16.msra.mxu0 %v1074
    %1089 = vmatmul.bf16.gmra.mxu0 %v1079
    %v1090 = vpop.f32.mrf.mxu0
    %v1091 = vadd.f32 0.0, %v1090
    %v1092 = vpop.f32.mrf.mxu0
    %1093 = vdwg.mxu0
    %1094 = vmatpush.bf16.msra.mxu0 0
    %1095 = vmatpush.bf16.msra.mxu0 0
    %1096 = vmatpush.bf16.msra.mxu0 0
    %1097 = vmatpush.bf16.msra.mxu0 0
    %1098 = vmatpush.bf16.msra.mxu0 0
    %1099 = vmatpush.bf16.msra.mxu0 0
    %1100 = vmatpush.bf16.msra.mxu0 %v1077
    %1101 = vmatpush.bf16.msra.mxu0 %v1075
    %1102 = vmatmul.bf16.gmra.mxu0 %v1079
    %v1103 = vpop.f32.mrf.mxu0
    %v1104 = vadd.f32 0.0, %v1103
    %v1105 = vpop.f32.mrf.mxu0
    %1106 = vdwg.mxu0
    %v1107 = vld [vmem:[#allocation2 + $0x58] sm:$0xf]
    %v1108 = vld [vmem:[#allocation2 + $0x5c] sm:$0xf]
    %v1109 = vld [vmem:[#allocation2 + $0x60] sm:$0xf]
    %v1110 = vld [vmem:[#allocation2 + $0x64] sm:$0xf]
    %v1111 = vld [vmem:[#allocation2 + $0x68] sm:$0xf]
    %v1112 = vld [vmem:[#allocation2 + $0x6c] sm:$0xf]
    %v1113 = vld [vmem:[#allocation2 + $0x70] sm:$0xf]
    %v1114 = vld [vmem:[#allocation2 + $0x74] sm:$0xf]
    %v1115 = vld [vmem:[#allocation2 + $0x78] sm:$0xf]
    %v1116 = vld [vmem:[#allocation2 + $0x7c] sm:$0xf]
    %v1117 = vld [vmem:[#allocation2 + $0x80] sm:$0xf]
    %v1118 = vld [vmem:[#allocation2 + $0x84] sm:$0xf]
    %v1119 = vld [vmem:[#allocation2 + $0x88] sm:$0xf]
    %v1120 = vld [vmem:[#allocation2 + $0x8c] sm:$0xf]
    %v1121 = vld [vmem:[#allocation2 + $0x90] sm:$0xf]
    %v1122 = vld [vmem:[#allocation2 + $0x94] sm:$0xf]
    %v1123 = vld [vmem:[#allocation2 + $0x98] sm:$0xf]
    %v1124 = vld [vmem:[#allocation2 + $0x9c] sm:$0xf]
    %v1125 = vld [vmem:[#allocation2 + $0xa0] sm:$0xf]
    %v1126 = vld [vmem:[#allocation2 + $0xa4] sm:$0xf]
    %v1127 = vld [vmem:[#allocation2 + $0xa8] sm:$0xf]
    %v1128 = vld [vmem:[#allocation2 + $0xac] sm:$0xf]
    %v1129 = vld [vmem:[#allocation2 + $0xb0] sm:$0xf]
    %v1130 = vld [vmem:[#allocation2 + $0xb4] sm:$0xf]
    %v1131 = vld [vmem:[#allocation2 + $0xb8] sm:$0xf]
    %v1132 = vld [vmem:[#allocation2 + $0xbc] sm:$0xf]
    %v1133 = vld [vmem:[#allocation2 + $0xc0] sm:$0xf]
    %v1134 = vld [vmem:[#allocation2 + $0xc4] sm:$0xf]
    %v1135 = vld [vmem:[#allocation2 + $0xc8] sm:$0xf]
    %v1136 = vld [vmem:[#allocation2 + $0xcc] sm:$0xf]
    %v1137 = vld [vmem:[#allocation2 + $0xd0] sm:$0xf]
    %v1138 = vld [vmem:[#allocation2 + $0xd4] sm:$0xf]
    %v1139 = vpack.c.bf16 %v1091, %v1091
    %v1140 = vpack.c.bf16 %v1104, %v1104
    %v1141 = vld [vmem:[#allocation5 + $0x68] sm:$0x1]
    %v1142 = vperm.slane %v1141, 0
    %v1175 = vunpack.c.l.b16 %v1107
    %v1176 = vunpack.c.l.b16 %v1108
    %v1177 = vunpack.c.l.b16 %v1109
    %v1178 = vunpack.c.l.b16 %v1110
    %v1179 = vunpack.c.l.b16 %v1111
    %v1180 = vunpack.c.l.b16 %v1112
    %v1181 = vunpack.c.l.b16 %v1113
    %v1182 = vunpack.c.l.b16 %v1114
    %v1183 = vunpack.c.l.b16 %v1115
    %v1184 = vunpack.c.l.b16 %v1116
    %v1185 = vunpack.c.l.b16 %v1117
    %v1186 = vunpack.c.l.b16 %v1118
    %v1187 = vunpack.c.l.b16 %v1119
    %v1188 = vunpack.c.l.b16 %v1120
    %v1189 = vunpack.c.l.b16 %v1121
    %v1190 = vunpack.c.l.b16 %v1122
    %v1191 = vunpack.c.l.b16 %v1123
    %v1192 = vunpack.c.l.b16 %v1124
    %v1193 = vunpack.c.l.b16 %v1125
    %v1194 = vunpack.c.l.b16 %v1126
    %v1195 = vunpack.c.l.b16 %v1127
    %v1196 = vunpack.c.l.b16 %v1128
    %v1197 = vunpack.c.l.b16 %v1129
    %v1198 = vunpack.c.l.b16 %v1130
    %v1199 = vunpack.c.l.b16 %v1131
    %v1200 = vunpack.c.l.b16 %v1132
    %v1201 = vunpack.c.l.b16 %v1133
    %v1202 = vunpack.c.l.b16 %v1134
    %v1203 = vunpack.c.l.b16 %v1135
    %v1204 = vunpack.c.l.b16 %v1136
    %v1205 = vunpack.c.l.b16 %v1137
    %v1206 = vunpack.c.l.b16 %v1138
    %v1207 = vpack.c.b16 %v1176, %v1175
    %v1208 = vpack.c.b16 %v1178, %v1177
    %v1209 = vpack.c.b16 %v1180, %v1179
    %v1210 = vpack.c.b16 %v1182, %v1181
    %v1211 = vpack.c.b16 %v1184, %v1183
    %v1212 = vpack.c.b16 %v1186, %v1185
    %v1213 = vpack.c.b16 %v1188, %v1187
    %v1214 = vpack.c.b16 %v1190, %v1189
    %v1215 = vpack.c.b16 %v1192, %v1191
    %v1216 = vpack.c.b16 %v1194, %v1193
    %v1217 = vpack.c.b16 %v1196, %v1195
    %v1218 = vpack.c.b16 %v1198, %v1197
    %v1219 = vpack.c.b16 %v1200, %v1199
    %v1220 = vpack.c.b16 %v1202, %v1201
    %v1221 = vpack.c.b16 %v1204, %v1203
    %v1222 = vpack.c.b16 %v1206, %v1205
    %1239 = vmatpush.bf16.msra.mxu0 %v1214
    %1240 = vmatpush.bf16.msra.mxu0 %v1213
    %1241 = vmatpush.bf16.msra.mxu0 %v1212
    %1242 = vmatpush.bf16.msra.mxu0 %v1211
    %1243 = vmatpush.bf16.msra.mxu0 %v1210
    %1244 = vmatpush.bf16.msra.mxu0 %v1209
    %1245 = vmatpush.bf16.msra.mxu0 %v1208
    %1246 = vmatpush.bf16.msra.mxu0 %v1207
    %1247 = vmatmul.bf16.gmra.mxu0 %v1139
    %v1248 = vpop.f32.mrf.mxu0
    %v1249 = vadd.f32 %v1142, %v1248
    %v1250 = vpop.f32.mrf.mxu0
    %1251 = vdwg.mxu0
    %1252 = vmatpush.bf16.msra.mxu0 %v1222
    %1253 = vmatpush.bf16.msra.mxu0 %v1221
    %1254 = vmatpush.bf16.msra.mxu0 %v1220
    %1255 = vmatpush.bf16.msra.mxu0 %v1219
    %1256 = vmatpush.bf16.msra.mxu0 %v1218
    %1257 = vmatpush.bf16.msra.mxu0 %v1217
    %1258 = vmatpush.bf16.msra.mxu0 %v1216
    %1259 = vmatpush.bf16.msra.mxu0 %v1215
    %1260 = vmatmul.bf16.gmra.mxu0 %v1140
    %v1261 = vpop.f32.mrf.mxu0
    %v1262 = vadd.f32 %v1249, %v1261
    %v1263 = vpop.f32.mrf.mxu0
    %1264 = vdwg.mxu0
    %v1265 = vmax.f32 %v1262, 0.0
    %v1266 = vld [vmem:[#allocation2 + $0xd8] sm:$0xf]
    %v1267 = vld [vmem:[#allocation2 + $0xdc] sm:$0xf]
    %v1268 = vld [vmem:[#allocation2 + $0xe0] sm:$0xf]
    %v1269 = vld [vmem:[#allocation2 + $0xe4] sm:$0xf]
    %v1270 = vld [vmem:[#allocation2 + $0xe8] sm:$0xf]
    %v1271 = vld [vmem:[#allocation2 + $0xec] sm:$0xf]
    %v1272 = vld [vmem:[#allocation2 + $0xf0] sm:$0xf]
    %v1273 = vld [vmem:[#allocation2 + $0xf4] sm:$0xf]
    %v1274 = vld [vmem:[#allocation2 + $0xf8] sm:$0xf]
    %v1275 = vld [vmem:[#allocation2 + $0xfc] sm:$0xf]
    %v1276 = vld [vmem:[#allocation2 + $0x100] sm:$0xf]
    %v1277 = vld [vmem:[#allocation2 + $0x104] sm:$0xf]
    %v1278 = vld [vmem:[#allocation2 + $0x108] sm:$0xf]
    %v1279 = vld [vmem:[#allocation2 + $0x10c] sm:$0xf]
    %v1280 = vld [vmem:[#allocation2 + $0x110] sm:$0xf]
    %v1281 = vld [vmem:[#allocation2 + $0x114] sm:$0xf]
    %v1282 = vpack.c.bf16 %v1265, %v1265
    %v1283 = vld [vmem:[#allocation5 + $0x70] sm:$0x1]
    %v1284 = vperm.slane %v1283, 0
    %v1301 = vunpack.c.l.b16 %v1266
    %v1302 = vunpack.c.l.b16 %v1267
    %v1303 = vunpack.c.l.b16 %v1268
    %v1304 = vunpack.c.l.b16 %v1269
    %v1305 = vunpack.c.l.b16 %v1270
    %v1306 = vunpack.c.l.b16 %v1271
    %v1307 = vunpack.c.l.b16 %v1272
    %v1308 = vunpack.c.l.b16 %v1273
    %v1309 = vunpack.c.l.b16 %v1274
    %v1310 = vunpack.c.l.b16 %v1275
    %v1311 = vunpack.c.l.b16 %v1276
    %v1312 = vunpack.c.l.b16 %v1277
    %v1313 = vunpack.c.l.b16 %v1278
    %v1314 = vunpack.c.l.b16 %v1279
    %v1315 = vunpack.c.l.b16 %v1280
    %v1316 = vunpack.c.l.b16 %v1281
    %v1317 = vpack.c.b16 %v1302, %v1301
    %v1318 = vpack.c.b16 %v1304, %v1303
    %v1319 = vpack.c.b16 %v1306, %v1305
    %v1320 = vpack.c.b16 %v1308, %v1307
    %v1321 = vpack.c.b16 %v1310, %v1309
    %v1322 = vpack.c.b16 %v1312, %v1311
    %v1323 = vpack.c.b16 %v1314, %v1313
    %v1324 = vpack.c.b16 %v1316, %v1315
    %1333 = vmatpush.bf16.msra.mxu0 %v1324
    %1334 = vmatpush.bf16.msra.mxu0 %v1323
    %1335 = vmatpush.bf16.msra.mxu0 %v1322
    %1336 = vmatpush.bf16.msra.mxu0 %v1321
    %1337 = vmatpush.bf16.msra.mxu0 %v1320
    %1338 = vmatpush.bf16.msra.mxu0 %v1319
    %1339 = vmatpush.bf16.msra.mxu0 %v1318
    %1340 = vmatpush.bf16.msra.mxu0 %v1317
    %1341 = vmatmul.bf16.gmra.mxu0 %v1282
    %v1342 = vpop.f32.mrf.mxu0
    %v1343 = vadd.f32 %v1284, %v1342
    %v1344 = vpop.f32.mrf.mxu0
    %1345 = vdwg.mxu0
    %v1346 = vmax.f32 %v1343, 0.0
    %v1347 = vld [vmem:[#allocation2 + $0x118] sm:$0xf]
    %v1348 = vld [vmem:[#allocation2 + $0x11c] sm:$0xf]
    %v1349 = vld [vmem:[#allocation2 + $0x120] sm:$0xf]
    %v1350 = vld [vmem:[#allocation2 + $0x124] sm:$0xf]
    %v1351 = vld [vmem:[#allocation2 + $0x128] sm:$0xf]
    %v1352 = vld [vmem:[#allocation2 + $0x12c] sm:$0xf]
    %v1353 = vld [vmem:[#allocation2 + $0x130] sm:$0xf]
    %v1354 = vld [vmem:[#allocation2 + $0x134] sm:$0xf]
    %v1355 = vpack.c.bf16 %v1346, %v1346
    %v1356 = vld [vmem:[#allocation5 + $0x78] sm:$0x1]
    %v1357 = vperm.slane %v1356, 0
    %v1366 = vunpack.c.l.b16 %v1347
    %v1367 = vunpack.c.l.b16 %v1348
    %v1368 = vunpack.c.l.b16 %v1349
    %v1369 = vunpack.c.l.b16 %v1350
    %v1370 = vunpack.c.l.b16 %v1351
    %v1371 = vunpack.c.l.b16 %v1352
    %v1372 = vunpack.c.l.b16 %v1353
    %v1373 = vunpack.c.l.b16 %v1354
    %v1374 = vpack.c.b16 %v1367, %v1366
    %v1375 = vpack.c.b16 %v1369, %v1368
    %v1376 = vpack.c.b16 %v1371, %v1370
    %v1377 = vpack.c.b16 %v1373, %v1372
    %vm1382 = vcmask 523264
    %v1384 = vsel %vm1382, %v1355, 0
    %1386 = vmatpush.bf16.msra.mxu0 0
    %1387 = vmatpush.bf16.msra.mxu0 0
    %1388 = vmatpush.bf16.msra.mxu0 0
    %1389 = vmatpush.bf16.msra.mxu0 0
    %1390 = vmatpush.bf16.msra.mxu0 %v1377
    %1391 = vmatpush.bf16.msra.mxu0 %v1376
    %1392 = vmatpush.bf16.msra.mxu0 %v1375
    %1393 = vmatpush.bf16.msra.mxu0 %v1374
    %1394 = vmatmul.bf16.gmra.mxu0 %v1384
    %v1395 = vpop.f32.mrf.mxu0
    %v1396 = vadd.f32 %v1357, %v1395
    %v1397 = vpop.f32.mrf.mxu0
    %1398 = vdwg.mxu0
    %v1399 = vmax.f32 %v1396, 0.0
    %v1400 = vld [vmem:[#allocation2 + $0x138] sm:$0xf]
    %v1401 = vld [vmem:[#allocation2 + $0x13c] sm:$0xf]
    %v1402 = vld [vmem:[#allocation2 + $0x140] sm:$0xf]
    %v1403 = vld [vmem:[#allocation2 + $0x144] sm:$0xf]
    %v1404 = vpack.c.bf16 %v1399, %v1399
    %v1405 = vld [vmem:[#allocation5 + $0x80] sm:$0x1]
    %v1406 = vperm.slane %v1405, 0
    %v1411 = vunpack.c.l.b16 %v1400
    %v1412 = vunpack.c.l.b16 %v1401
    %v1413 = vunpack.c.l.b16 %v1402
    %v1414 = vunpack.c.l.b16 %v1403
    %v1415 = vpack.c.b16 %v1412, %v1411
    %v1416 = vpack.c.b16 %v1414, %v1413
    %v1420 = vsel %vm319, %v1404, 0
    %1422 = vmatpush.bf16.msra.mxu0 0
    %1423 = vmatpush.bf16.msra.mxu0 0
    %1424 = vmatpush.bf16.msra.mxu0 0
    %1425 = vmatpush.bf16.msra.mxu0 0
    %1426 = vmatpush.bf16.msra.mxu0 0
    %1427 = vmatpush.bf16.msra.mxu0 0
    %1428 = vmatpush.bf16.msra.mxu0 %v1416
    %1429 = vmatpush.bf16.msra.mxu0 %v1415
    %1430 = vmatmul.bf16.gmra.mxu0 %v1420
    %v1431 = vpop.f32.mrf.mxu0
    %v1432 = vadd.f32 %v1406, %v1431
    %v1433 = vpop.f32.mrf.mxu0
    %1434 = vdwg.mxu0
    %vm1435 = vcmask 25600
    %1436 = vst.msk [vmem:[#allocation7] sm:$0x3] %vm1435, %v1432
    // Predicated region
    $region22: #{forecasting_forward.1} parent=1 // pred_check
      _
    $region23: #{forecasting_forward.1} parent=1 // pred_check_branch
      %1438 = sbr.rel (0) target = $region25
    $region24: #{forecasting_forward.1} parent=1 // pred_region
      %1440 = vsyncadd [#allocation4], 0
      %s1442 = sshll.u32 [#allocation7], 4
      %s1443 = int_to_ptr.vmem [resolvable:$true] %s1442
      %s1444 = sshll.u32 %s3, 4
      %s1445 = int_to_ptr.hbm [resolvable:$true] %s1444
      %1447 = dma.vmem_to_hbm [thread:$0]  %s1443, 32, %s1445, [#allocation4]
    $region25: #{forecasting_forward.1} parent=1 // pred_fallthru
      _
    // Predicated region
    $region26: #{forecasting_forward.1} parent=1 // pred_check
      _
    $region27: #{forecasting_forward.1} parent=1 // pred_check_branch
      %1449 = sbr.rel (0) target = $region29
    $region28: #{forecasting_forward.1} parent=1 // pred_region
      %1451 = dma.done [#allocation4], 32
    $region29: #{forecasting_forward.1} parent=1 // pred_fallthru
      _
    %1452 = vsyncpa [#allocation3], 1
    %1453 = vsyncpa [#allocation6], 1
    %1454 = vsyncpa [#allocation4], 1

</llo_original>
